<compile_context>
chip_gen: v7x
topology: tpu7x:2x2x1
jax: 0.10.0
libtpu: 0.0.40
codegen_flags: <defaults>
</compile_context>

<pallas_src>
import functools

import jax
import jax.numpy as jnp
from jax.experimental import pallas as pl
from jax.experimental.pallas import tpu as pltpu

_NEG_INF = -1e30
_VMEM_LIMIT = 64 * 1024 * 1024     # explicit scoped-VMEM budget (fits all gens)
_ROWS_CAP = 512                    # rows per transformer-block grid step
_ROW_TILE_CAP = 512                # rows per lm_head grid step


# ----------------------------- kernels --------------------------------------

def _layernorm(x, w, b, eps=1e-5):
    # PyTorch nn.LayerNorm: biased variance over last dim, eps inside rsqrt.
    mu = jnp.mean(x, axis=-1, keepdims=True)
    var = jnp.mean((x - mu) ** 2, axis=-1, keepdims=True)
    return (x - mu) * jax.lax.rsqrt(var + eps) * w + b


def gpt_blocks_kernel(x_ref, bias_ref, ln1w_ref, ln1b_ref, wqkv_ref, wo_ref,
                      bo_ref, ln2w_ref, ln2b_ref, w1_ref, b1_ref, w2_ref,
                      b2_ref, out_ref, *, num_heads, head_dim, seq):
    """One grid step = one transformer block applied to one batch tile.

    grid = (batch_tiles, n_layer); the residual stream lives in the output
    block, which stays VMEM-resident across the layer axis (same block index).
    """
    l = pl.program_id(1)

    @pl.when(l == 0)
    def _():
        out_ref[...] = x_ref[...]          # initialize residual stream

    x = out_ref[...]                       # (rows, C) f32, rows = b_tile * T
    rows, C = x.shape
    bt = rows // seq
    scale = head_dim ** -0.5

    # ---- pre-LN fused multi-head causal self-attention ----
    h = _layernorm(x, ln1w_ref[...], ln1b_ref[...])
    qkv = jnp.dot(h.astype(jnp.bfloat16), wqkv_ref[...],
                  preferred_element_type=jnp.float32)        # (rows, 3C) f32

    # precomputed additive causal bias (0 / -1e30), hoisted out of the head loop
    bias = jnp.broadcast_to(bias_ref[...][None, :, :], (bt, seq, seq))

    head_outs = []
    for hh in range(num_heads):            # static unroll; scores only
        lo = hh * head_dim
        # fold the 1/sqrt(hd) scale into q: (rows, hd) multiply, not (T, T)
        qh = (qkv[:, lo:lo + head_dim] * scale).reshape(bt, seq, head_dim)
        kh = qkv[:, C + lo:C + lo + head_dim].reshape(bt, seq, head_dim)
        vh = qkv[:, 2 * C + lo:2 * C + lo + head_dim].reshape(bt, seq, head_dim)
        s = jnp.einsum('bqd,bkd->bqk',
                       qh.astype(jnp.bfloat16), kh.astype(jnp.bfloat16),
                       preferred_element_type=jnp.float32) + bias
        m = jnp.max(s, axis=-1, keepdims=True)
        p = jnp.exp(s - m)                                   # unnormalized probs
        denom = jnp.sum(p, axis=-1, keepdims=True)           # (bt, T, 1)
        oh = jnp.einsum('bqk,bkd->bqd',
                        p.astype(jnp.bfloat16), vh.astype(jnp.bfloat16),
                        preferred_element_type=jnp.float32)
        # deferred softmax normalization: (T, hd)-sized multiply instead of (T, T)
        oh = oh * pl.reciprocal(denom, approx=True)
        head_outs.append(oh.reshape(rows, head_dim))

    attn = jnp.concatenate(head_outs, axis=-1)               # (rows, C)
    sa = jnp.dot(attn.astype(jnp.bfloat16), wo_ref[...],
                 preferred_element_type=jnp.float32) + bo_ref[...]
    x = x + sa                                               # dropout = identity

    # ---- pre-LN feed-forward ----
    h2 = _layernorm(x, ln2w_ref[...], ln2b_ref[...])
    ff = jnp.dot(h2.astype(jnp.bfloat16), w1_ref[...],
                 preferred_element_type=jnp.float32) + b1_ref[...]
    ff = jnp.maximum(ff, 0.0)
    ff = jnp.dot(ff.astype(jnp.bfloat16), w2_ref[...],
                 preferred_element_type=jnp.float32) + b2_ref[...]
    out_ref[...] = x + ff                                    # dropout = identity


def lm_head_kernel(x_ref, lnw_ref, lnb_ref, tgt_ref, w_ref, b_ref,
                   logits_ref, lse_ref, tl_ref,
                   h_bf, m_s, l_s, t_s, *, v_tile):
    """grid = (row_tiles, vocab_tiles); vocab axis is the inner reduction axis.

    LN_f is hoisted: computed once per row tile (v == 0) into a bf16 scratch.
    Online logsumexp + target-logit gather are fused so the loss never re-reads
    the logits from HBM.
    """
    v = pl.program_id(1)

    @pl.when(v == 0)
    def _():
        h_bf[...] = _layernorm(x_ref[...], lnw_ref[...],
                               lnb_ref[...]).astype(jnp.bfloat16)
        m_s[...] = jnp.full_like(m_s, _NEG_INF)
        l_s[...] = jnp.zeros_like(l_s)
        t_s[...] = jnp.zeros_like(t_s)

    logits = jnp.dot(h_bf[...], w_ref[...],
                     preferred_element_type=jnp.float32) + b_ref[...]
    logits_ref[...] = logits

    # online logsumexp over vocab tiles
    m_new = jnp.maximum(m_s[...], jnp.max(logits, axis=-1, keepdims=True))
    alpha = jnp.exp(m_s[...] - m_new)
    l_s[...] = alpha * l_s[...] + jnp.sum(jnp.exp(logits - m_new),
                                          axis=-1, keepdims=True)
    m_s[...] = m_new

    # target-logit gather within this vocab tile
    rows, vt = logits.shape
    col = jax.lax.broadcasted_iota(jnp.int32, (rows, vt), 1) + v * v_tile
    hit = col == tgt_ref[...]
    t_s[...] += jnp.sum(jnp.where(hit, logits, 0.0), axis=-1, keepdims=True)

    @pl.when(v == pl.num_programs(1) - 1)
    def _():
        lse_ref[...] = m_s[...] + jnp.log(l_s[...])
        tl_ref[...] = t_s[...]


# ----------------------------- tiling helpers --------------------------------

def _batch_tiles(B, T, rows_cap=_ROWS_CAP):
    """Smallest divisor of B such that rows = (B // bt) * T fits the cap
    (and satisfies the (8, .) sublane rule). Bounds VMEM intermediates; on
    single-TC chips small bt also avoids re-streaming layer weights."""
    best = 1
    for bt in range(1, B + 1):
        if B % bt:
            continue
        rows = (B // bt) * T
        if rows % 8 and bt != 1:
            continue
        best = bt
        if rows <= rows_cap:
            break
    return best


def _row_tile(n, cap=_ROW_TILE_CAP):
    """Largest multiple-of-8 divisor of n that is <= cap (else n itself)."""
    if n <= cap:
        return n
    d = cap - (cap % 8)
    while d >= 8:
        if n % d == 0:
            return d
        d -= 8
    return n


# ----------------------------- forward --------------------------------------

def gpt_forward(params, idx, targets=None):
    """Mirrors GPT.forward: returns (logits, loss)."""
    B, T = idx.shape
    C = params['embd_size']
    nh = params['num_heads']
    hd = C // nh
    L = params['n_layer']
    V = params['vocab_size']

    # embedding gathers are plain-JAX glue
    tok_emb = params['tok_emb'][idx]                  # (B, T, C)
    pos_emb = params['pos_emb'][:T]                   # (T, C)
    x = (tok_emb + pos_emb[None, :, :]).astype(jnp.float32).reshape(B * T, C)

    # causal additive bias, built once and kept VMEM-resident in the kernel
    qi = jax.lax.broadcasted_iota(jnp.int32, (T, T), 0)
    ki = jax.lax.broadcasted_iota(jnp.int32, (T, T), 1)
    causal_bias = jnp.where(qi >= ki, 0.0, _NEG_INF).astype(jnp.float32)

    b_tiles = _batch_tiles(B, T)
    rows = (B // b_tiles) * T

    blk = functools.partial(gpt_blocks_kernel, num_heads=nh, head_dim=hd, seq=T)
    wspec = lambda shp: pl.BlockSpec((None,) + shp, lambda b, l: (l, 0, 0))

    x = pl.pallas_call(
        blk,
        out_shape=jax.ShapeDtypeStruct((B * T, C), jnp.float32),
        grid=(b_tiles, L),
        in_specs=[
            pl.BlockSpec((rows, C), lambda b, l: (b, 0)),   # residual init (aliased)
            pl.BlockSpec((T, T), lambda b, l: (0, 0)),      # causal bias (resident)
            wspec((1, C)), wspec((1, C)),                   # ln1 w/b
            wspec((C, 3 * C)),                              # fused wqkv (bf16)
            wspec((C, C)),                                  # wo (bf16)
            wspec((1, C)),                                  # bo
            wspec((1, C)), wspec((1, C)),                   # ln2 w/b
            wspec((C, 4 * C)), wspec((1, 4 * C)),           # w1 (bf16), b1
            wspec((4 * C, C)), wspec((1, C)),               # w2 (bf16), b2
        ],
        out_specs=pl.BlockSpec((rows, C), lambda b, l: (b, 0)),
        input_output_aliases={0: 0},                        # no 2nd HBM residual buf
        compiler_params=pltpu.CompilerParams(
            dimension_semantics=("parallel", "arbitrary"),
            vmem_limit_bytes=_VMEM_LIMIT),
    )(x, causal_bias, params['ln1w'], params['ln1b'], params['wqkv'],
      params['wo'], params['bo'], params['ln2w'], params['ln2b'],
      params['w1'], params['b1'], params['w2'], params['b2'])

    # ---- lm_head: LN_f (hoisted) + vocab-tiled projection + fused CE pieces ----
    VT = 512 if V >= 512 else (256 if V >= 256 else 128)
    VP = pl.cdiv(V, VT) * VT
    lm_w = params['lm_w']
    lm_b = params['lm_b']
    if VP != V:                       # pad vocab to lane-dense tiles; padded
        lm_w = jnp.pad(lm_w, ((0, 0), (0, VP - V)))             # cols -> -1e30
        lm_b = jnp.pad(lm_b, ((0, 0), (0, VP - V)), constant_values=_NEG_INF)

    RT = _row_tile(B * T)
    if targets is None:
        tgt_flat = jnp.zeros((B * T, 1), jnp.int32)
    else:
        tgt_flat = targets.reshape(B * T, 1).astype(jnp.int32)

    head = functools.partial(lm_head_kernel, v_tile=VT)
    logits_p, lse, tgt_logit = pl.pallas_call(
        head,
        out_shape=(jax.ShapeDtypeStruct((B * T, VP), jnp.float32),
                   jax.ShapeDtypeStruct((B * T, 1), jnp.float32),
                   jax.ShapeDtypeStruct((B * T, 1), jnp.float32)),
        grid=(B * T // RT, VP // VT),
        in_specs=[
            pl.BlockSpec((RT, C), lambda r, v: (r, 0)),
            pl.BlockSpec((1, C), lambda r, v: (0, 0)),
            pl.BlockSpec((1, C), lambda r, v: (0, 0)),
            pl.BlockSpec((RT, 1), lambda r, v: (r, 0)),
            pl.BlockSpec((C, VT), lambda r, v: (0, v)),
            pl.BlockSpec((1, VT), lambda r, v: (0, v)),
        ],
        out_specs=(pl.BlockSpec((RT, VT), lambda r, v: (r, v)),
                   pl.BlockSpec((RT, 1), lambda r, v: (r, 0)),
                   pl.BlockSpec((RT, 1), lambda r, v: (r, 0))),
        scratch_shapes=[pltpu.VMEM((RT, C), jnp.bfloat16),   # LN_f(x) once/row tile
                        pltpu.VMEM((RT, 1), jnp.float32),    # running max
                        pltpu.VMEM((RT, 1), jnp.float32),    # running sumexp
                        pltpu.VMEM((RT, 1), jnp.float32)],   # target logit
        compiler_params=pltpu.CompilerParams(
            dimension_semantics=("parallel", "arbitrary"),
            vmem_limit_bytes=_VMEM_LIMIT),
    )(x, params['lnfw'], params['lnfb'], tgt_flat, lm_w, lm_b)

    logits = logits_p[:, :V].reshape(B, T, V)
    if targets is None:
        loss = None
    else:
        # F.cross_entropy (mean): lse and target logit computed in-kernel
        loss = jnp.mean(lse[:, 0] - tgt_logit[:, 0])
    return logits, loss


# ----------------------------- reference (pure JAX, f32) ---------------------

def gpt_forward_ref(params, idx):
    B, T = idx.shape
    C = params['embd_size']
    nh = params['num_heads']
    hd = C // nh
    x = (params['tok_emb'][idx] + params['pos_emb'][:T][None]).astype(jnp.float32)
    x = x.reshape(B * T, C)

    qi = jax.lax.broadcasted_iota(jnp.int32, (T, T), 0)
    ki = jax.lax.broadcasted_iota(jnp.int32, (T, T), 1)
    causal = (qi >= ki)[None, :, :]

    def ln(v, w, b):
        mu = jnp.mean(v, -1, keepdims=True)
        var = jnp.mean((v - mu) ** 2, -1, keepdims=True)
        return (v - mu) * jax.lax.rsqrt(var + 1e-5) * w + b

    for l in range(params['n_layer']):
        h = ln(x, params['ln1w'][l, 0], params['ln1b'][l, 0])
        qkv = h @ params['wqkv'][l].astype(jnp.float32)
        heads = []
        for hh in range(nh):
            lo = hh * hd
            q = qkv[:, lo:lo + hd].reshape(B, T, hd)
            k = qkv[:, C + lo:C + lo + hd].reshape(B, T, hd)
            v = qkv[:, 2 * C + lo:2 * C + lo + hd].reshape(B, T, hd)
            s = jnp.einsum('bqd,bkd->bqk', q, k) * hd ** -0.5
            s = jnp.where(causal, s, -1e30)
            p = jax.nn.softmax(s, axis=-1)
            heads.append(jnp.einsum('bqk,bkd->bqd', p, v).reshape(B * T, hd))
        sa = (jnp.concatenate(heads, -1) @ params['wo'][l].astype(jnp.float32)
              + params['bo'][l, 0])
        x = x + sa
        h2 = ln(x, params['ln2w'][l, 0], params['ln2b'][l, 0])
        ff = jnp.maximum(h2 @ params['w1'][l].astype(jnp.float32)
                         + params['b1'][l, 0], 0.0)
        x = x + ff @ params['w2'][l].astype(jnp.float32) + params['b2'][l, 0]

    h = ln(x, params['lnfw'][0], params['lnfb'][0])
    logits = h @ params['lm_w'].astype(jnp.float32) + params['lm_b'][0]
    return logits.reshape(B, T, -1)


# ----------------------------- params ---------------------------------------

def init_params(key, vocab_size, embd_size, block_size, num_heads, n_layer):
    C = embd_size
    F = 4 * C

    def nrm(k, shape, scale=0.02):
        return scale * jax.random.normal(k, shape, dtype=jnp.float32)

    keys = jax.random.split(key, 4)
    params = {
        'vocab_size': vocab_size,
        'embd_size': C,
        'num_heads': num_heads,
        'n_layer': n_layer,
        'tok_emb': nrm(keys[0], (vocab_size, C), 1.0),
        'pos_emb': nrm(keys[1], (block_size, C), 1.0),
        'lnfw': jnp.ones((1, C), jnp.float32),
        'lnfb': jnp.zeros((1, C), jnp.float32),
        'lm_w': nrm(keys[2], (C, vocab_size)).astype(jnp.bfloat16),
        'lm_b': jnp.zeros((1, vocab_size), jnp.float32),
    }

    wqkv, wo, w1, w2 = [], [], [], []
    lkeys = jax.random.split(keys[3], n_layer)
    for l in range(n_layer):
        k1, k2, k3, k4 = jax.random.split(lkeys[l], 4)
        wqkv.append(nrm(k1, (C, 3 * C)))   # [q | k | v], heads packed along cols
        wo.append(nrm(k2, (C, C)))
        w1.append(nrm(k3, (C, F)))
        w2.append(nrm(k4, (F, C)))

    params.update({
        'ln1w': jnp.ones((n_layer, 1, C), jnp.float32),
        'ln1b': jnp.zeros((n_layer, 1, C), jnp.float32),
        'wqkv': jnp.stack(wqkv).astype(jnp.bfloat16),
        'wo': jnp.stack(wo).astype(jnp.bfloat16),
        'bo': jnp.zeros((n_layer, 1, C), jnp.float32),
        'ln2w': jnp.ones((n_layer, 1, C), jnp.float32),
        'ln2b': jnp.zeros((n_layer, 1, C), jnp.float32),
        'w1': jnp.stack(w1).astype(jnp.bfloat16),
        'b1': jnp.zeros((n_layer, 1, F), jnp.float32),
        'w2': jnp.stack(w2).astype(jnp.bfloat16),
        'b2': jnp.zeros((n_layer, 1, C), jnp.float32),
    })
    return params


# ----------------------------- main ------------------------------------------

if __name__ == "__main__":
    VOCAB = 128
    EMBD = 32
    BLOCK = 8
    HEADS = 4
    LAYERS = 2
    B, T = 2, 8

    key = jax.random.PRNGKey(0)
    pkey, ikey, tkey = jax.random.split(key, 3)
    params = init_params(pkey, VOCAB, EMBD, BLOCK, HEADS, LAYERS)
    idx = jax.random.randint(ikey, (B, T), 0, VOCAB, dtype=jnp.int32)
    targets = jax.random.randint(tkey, (B, T), 0, VOCAB, dtype=jnp.int32)

    logits, loss = gpt_forward(params, idx, targets=targets)
    logits = jax.block_until_ready(logits)
    loss = jax.block_until_ready(loss)
    assert logits.shape == (B, T, VOCAB)
    assert bool(jnp.isfinite(loss))

    # correctness vs. pure-JAX f32 reference (bf16 matmuls => loose tolerance)
    ref = gpt_forward_ref(params, idx)
    err = float(jnp.max(jnp.abs(logits - ref)))
    assert err < 0.1, f"max |logits - ref| = {err}"

    # cross-check the fused in-kernel cross-entropy against plain JAX
    flat = ref.reshape(B * T, VOCAB)
    tgt = targets.reshape(B * T)
    ref_loss = jnp.mean(jax.nn.logsumexp(flat, axis=-1)
                        - jnp.take_along_axis(flat, tgt[:, None], axis=1)[:, 0])
    assert abs(float(loss) - float(ref_loss)) < 0.05

    # TODO(synk): generate() (autoregressive sampling loop + multinomial) is
    # host-side control flow and is not implemented as a kernel.
    print("KERNEL_OK")
</pallas_src>

<mosaic_0001>
module attributes {stable_mosaic.version = 11 : i64} {
  func.func @gpt_blocks_kernel(%arg0: i32, %arg1: i32, %arg2: memref<16x32xf32, #tpu.memory_space<vmem>>, %arg3: memref<8x8xf32, #tpu.memory_space<vmem>>, %arg4: memref<1x1x32xf32, #tpu.memory_space<vmem>>, %arg5: memref<1x1x32xf32, #tpu.memory_space<vmem>>, %arg6: memref<1x32x96xbf16, #tpu.memory_space<vmem>>, %arg7: memref<1x32x32xbf16, #tpu.memory_space<vmem>>, %arg8: memref<1x1x32xf32, #tpu.memory_space<vmem>>, %arg9: memref<1x1x32xf32, #tpu.memory_space<vmem>>, %arg10: memref<1x1x32xf32, #tpu.memory_space<vmem>>, %arg11: memref<1x32x128xbf16, #tpu.memory_space<vmem>>, %arg12: memref<1x1x128xf32, #tpu.memory_space<vmem>>, %arg13: memref<1x128x32xbf16, #tpu.memory_space<vmem>>, %arg14: memref<1x1x32xf32, #tpu.memory_space<vmem>>, %arg15: memref<16x32xf32, #tpu.memory_space<vmem>>) attributes {dimension_semantics = [#tpu.dimension_semantics<parallel>, #tpu.dimension_semantics<arbitrary>], iteration_bounds = array<i64: 1, 2>, scalar_prefetch = 0 : i64, scratch_operands = 0 : i64, tpu.core_type = #tpu.core_type<tc>, window_params = [{transform_indices = @transform_0, window_bounds = array<i64: 16, 32>}, {pipeline_mode = #tpu.pipeline_mode<synchronous>, transform_indices = @transform_1, window_bounds = array<i64: 8, 8>}, {transform_indices = @transform_2, window_bounds = array<i64: 1, 1, 32>}, {transform_indices = @transform_3, window_bounds = array<i64: 1, 1, 32>}, {transform_indices = @transform_4, window_bounds = array<i64: 1, 32, 96>}, {transform_indices = @transform_5, window_bounds = array<i64: 1, 32, 32>}, {transform_indices = @transform_6, window_bounds = array<i64: 1, 1, 32>}, {transform_indices = @transform_7, window_bounds = array<i64: 1, 1, 32>}, {transform_indices = @transform_8, window_bounds = array<i64: 1, 1, 32>}, {transform_indices = @transform_9, window_bounds = array<i64: 1, 32, 128>}, {transform_indices = @transform_10, window_bounds = array<i64: 1, 1, 128>}, {transform_indices = @transform_11, window_bounds = array<i64: 1, 128, 32>}, {transform_indices = @transform_12, window_bounds = array<i64: 1, 1, 32>}, {transform_indices = @transform_13, window_bounds = array<i64: 16, 32>}]} {
    %c0_i32 = arith.constant 0 : i32
    %0 = arith.cmpi eq, %arg1, %c0_i32 : i32
    %1 = arith.extui %0 : i1 to i32
    %c0_i32_0 = arith.constant 0 : i32
    %2 = arith.cmpi ne, %1, %c0_i32_0 : i32
    scf.if %2 {
      %c0_73 = arith.constant 0 : index
      %c0_74 = arith.constant 0 : index
      %198 = vector.load %arg2[%c0_73, %c0_74] : memref<16x32xf32, #tpu.memory_space<vmem>>, vector<16x32xf32>
      %c0_75 = arith.constant 0 : index
      %c0_76 = arith.constant 0 : index
      %199 = vector.load %arg15[%c0_75, %c0_76] : memref<16x32xf32, #tpu.memory_space<vmem>>, vector<16x32xf32>
      tpu.vector_store %arg15[%c0_75, %c0_76], %198 {strides = array<i32>} : memref<16x32xf32, #tpu.memory_space<vmem>>, vector<16x32xf32>,
    } else {
    }
    %c0 = arith.constant 0 : index
    %c0_1 = arith.constant 0 : index
    %3 = vector.load %arg15[%c0, %c0_1] : memref<16x32xf32, #tpu.memory_space<vmem>>, vector<16x32xf32>
    %c0_2 = arith.constant 0 : index
    %c0_3 = arith.constant 0 : index
    %c0_4 = arith.constant 0 : index
    %4 = vector.load %arg4[%c0_2, %c0_3, %c0_4] : memref<1x1x32xf32, #tpu.memory_space<vmem>>, vector<1x1x32xf32>
    %5 = vector.shape_cast %4 : vector<1x1x32xf32> to vector<1x32xf32>
    %c0_5 = arith.constant 0 : index
    %c0_6 = arith.constant 0 : index
    %c0_7 = arith.constant 0 : index
    %6 = vector.load %arg5[%c0_5, %c0_6, %c0_7] : memref<1x1x32xf32, #tpu.memory_space<vmem>>, vector<1x1x32xf32>
    %7 = vector.shape_cast %6 : vector<1x1x32xf32> to vector<1x32xf32>
    %cst = arith.constant dense<0.000000e+00> : vector<16xf32>
    %8 = vector.multi_reduction <add>, %3, %cst [1] : vector<16x32xf32> to vector<16xf32>
    %9 = vector.shape_cast %8 : vector<16xf32> to vector<16x1xf32>
    %cst_8 = arith.constant 3.200000e+01 : f32
    %10 = vector.broadcast %cst_8 : f32 to vector<16x1xf32>
    %11 = arith.divf %9, %10 : vector<16x1xf32>
    %12 = vector.broadcast %11 : vector<16x1xf32> to vector<16x32xf32>
    %13 = arith.subf %3, %12 : vector<16x32xf32>
    %14 = arith.mulf %13, %13 : vector<16x32xf32>
    %cst_9 = arith.constant dense<0.000000e+00> : vector<16xf32>
    %15 = vector.multi_reduction <add>, %14, %cst_9 [1] : vector<16x32xf32> to vector<16xf32>
    %16 = vector.shape_cast %15 : vector<16xf32> to vector<16x1xf32>
    %cst_10 = arith.constant 3.200000e+01 : f32
    %17 = vector.broadcast %cst_10 : f32 to vector<16x1xf32>
    %18 = arith.divf %16, %17 : vector<16x1xf32>
    %19 = vector.broadcast %11 : vector<16x1xf32> to vector<16x32xf32>
    %20 = arith.subf %3, %19 : vector<16x32xf32>
    %cst_11 = arith.constant 9.99999974E-6 : f32
    %21 = vector.broadcast %cst_11 : f32 to vector<16x1xf32>
    %22 = arith.addf %18, %21 : vector<16x1xf32>
    %23 = math.rsqrt %22 : vector<16x1xf32>
    %24 = vector.broadcast %23 : vector<16x1xf32> to vector<16x32xf32>
    %25 = arith.mulf %20, %24 : vector<16x32xf32>
    %26 = vector.broadcast %5 : vector<1x32xf32> to vector<16x32xf32>
    %27 = arith.mulf %25, %26 : vector<16x32xf32>
    %28 = vector.broadcast %7 : vector<1x32xf32> to vector<16x32xf32>
    %29 = arith.addf %27, %28 : vector<16x32xf32>
    %30 = arith.truncf %29 : vector<16x32xf32> to vector<16x32xbf16>
    %c0_12 = arith.constant 0 : index
    %c0_13 = arith.constant 0 : index
    %c0_14 = arith.constant 0 : index
    %31 = vector.load %arg6[%c0_12, %c0_13, %c0_14] : memref<1x32x96xbf16, #tpu.memory_space<vmem>>, vector<1x32x96xbf16>
    %32 = vector.shape_cast %31 : vector<1x32x96xbf16> to vector<32x96xbf16>
    %cst_15 = arith.constant dense<0.000000e+00> : vector<16x96xf32>
    %33 = tpu.matmul %30, %32, %cst_15 {dimension_numbers = #tpu.dot_dimension_numbers<[1], [0], [0], [1], [0, 0, 1, 1], [], []>} : vector<16x32xbf16>, vector<32x96xbf16>, vector<16x96xf32> -> vector<16x96xf32>
    %c0_16 = arith.constant 0 : index
    %c0_17 = arith.constant 0 : index
    %34 = vector.load %arg3[%c0_16, %c0_17] : memref<8x8xf32, #tpu.memory_space<vmem>>, vector<8x8xf32>
    %35 = vector.shape_cast %34 : vector<8x8xf32> to vector<1x8x8xf32>
    %36 = vector.shape_cast %35 : vector<1x8x8xf32> to vector<1x8x8xf32>
    %37 = vector.broadcast %36 : vector<1x8x8xf32> to vector<2x8x8xf32>
    %38 = vector.extract_strided_slice %33 {offsets = [0, 0], sizes = [16, 8], strides = [1, 1]} : vector<16x96xf32> to vector<16x8xf32>
    %cst_18 = arith.constant 0.353553385 : f32
    %39 = vector.broadcast %cst_18 : f32 to vector<16x8xf32>
    %40 = arith.mulf %38, %39 : vector<16x8xf32>
    %41 = vector.shape_cast %40 : vector<16x8xf32> to vector<2x8x8xf32>
    %42 = vector.extract_strided_slice %33 {offsets = [0, 32], sizes = [16, 8], strides = [1, 1]} : vector<16x96xf32> to vector<16x8xf32>
    %43 = vector.shape_cast %42 : vector<16x8xf32> to vector<2x8x8xf32>
    %44 = vector.extract_strided_slice %33 {offsets = [0, 64], sizes = [16, 8], strides = [1, 1]} : vector<16x96xf32> to vector<16x8xf32>
    %45 = vector.shape_cast %44 : vector<16x8xf32> to vector<2x8x8xf32>
    %46 = arith.truncf %41 : vector<2x8x8xf32> to vector<2x8x8xbf16>
    %47 = arith.truncf %43 : vector<2x8x8xf32> to vector<2x8x8xbf16>
    "tpu.trace_start"() <{level = 10 : i32, message = "bqd,bkd->bqk"}> : () -> ()
    %cst_19 = arith.constant dense<0.000000e+00> : vector<2x8x8xf32>
    %48 = tpu.matmul %46, %47, %cst_19 {dimension_numbers = #tpu.dot_dimension_numbers<[2], [2], [1], [1], [0, 0, 0, 1, 1, 1], [0], [0]>} : vector<2x8x8xbf16>, vector<2x8x8xbf16>, vector<2x8x8xf32> -> vector<2x8x8xf32>
    "tpu.trace_stop"() : () -> ()
    %49 = arith.addf %48, %37 : vector<2x8x8xf32>
    %cst_20 = arith.constant dense<0xFF800000> : vector<2x8xf32>
    %50 = vector.multi_reduction <maximumf>, %49, %cst_20 [2] : vector<2x8x8xf32> to vector<2x8xf32>
    %51 = vector.shape_cast %50 : vector<2x8xf32> to vector<2x8x1xf32>
    %52 = vector.broadcast %51 : vector<2x8x1xf32> to vector<2x8x8xf32>
    %53 = arith.subf %49, %52 : vector<2x8x8xf32>
    %54 = math.exp %53 : vector<2x8x8xf32>
    %cst_21 = arith.constant dense<0.000000e+00> : vector<2x8xf32>
    %55 = vector.multi_reduction <add>, %54, %cst_21 [2] : vector<2x8x8xf32> to vector<2x8xf32>
    %56 = vector.shape_cast %55 : vector<2x8xf32> to vector<2x8x1xf32>
    %57 = arith.truncf %54 : vector<2x8x8xf32> to vector<2x8x8xbf16>
    %58 = arith.truncf %45 : vector<2x8x8xf32> to vector<2x8x8xbf16>
    "tpu.trace_start"() <{level = 10 : i32, message = "bqk,bkd->bqd"}> : () -> ()
    %cst_22 = arith.constant dense<0.000000e+00> : vector<2x8x8xf32>
    %59 = tpu.matmul %57, %58, %cst_22 {dimension_numbers = #tpu.dot_dimension_numbers<[2], [1], [1], [2], [0, 0, 0, 1, 1, 2], [0], [0]>} : vector<2x8x8xbf16>, vector<2x8x8xbf16>, vector<2x8x8xf32> -> vector<2x8x8xf32>
    "tpu.trace_stop"() : () -> ()
    %60 = tpu.reciprocal %56 {approx = true} : vector<2x8x1xf32> -> vector<2x8x1xf32>
    %61 = vector.broadcast %60 : vector<2x8x1xf32> to vector<2x8x8xf32>
    %62 = arith.mulf %59, %61 : vector<2x8x8xf32>
    %63 = vector.shape_cast %62 : vector<2x8x8xf32> to vector<16x8xf32>
    %64 = vector.extract_strided_slice %33 {offsets = [0, 8], sizes = [16, 8], strides = [1, 1]} : vector<16x96xf32> to vector<16x8xf32>
    %cst_23 = arith.constant 0.353553385 : f32
    %65 = vector.broadcast %cst_23 : f32 to vector<16x8xf32>
    %66 = arith.mulf %64, %65 : vector<16x8xf32>
    %67 = vector.shape_cast %66 : vector<16x8xf32> to vector<2x8x8xf32>
    %68 = vector.extract_strided_slice %33 {offsets = [0, 40], sizes = [16, 8], strides = [1, 1]} : vector<16x96xf32> to vector<16x8xf32>
    %69 = vector.shape_cast %68 : vector<16x8xf32> to vector<2x8x8xf32>
    %70 = vector.extract_strided_slice %33 {offsets = [0, 72], sizes = [16, 8], strides = [1, 1]} : vector<16x96xf32> to vector<16x8xf32>
    %71 = vector.shape_cast %70 : vector<16x8xf32> to vector<2x8x8xf32>
    %72 = arith.truncf %67 : vector<2x8x8xf32> to vector<2x8x8xbf16>
    %73 = arith.truncf %69 : vector<2x8x8xf32> to vector<2x8x8xbf16>
    "tpu.trace_start"() <{level = 10 : i32, message = "bqd,bkd->bqk"}> : () -> ()
    %cst_24 = arith.constant dense<0.000000e+00> : vector<2x8x8xf32>
    %74 = tpu.matmul %72, %73, %cst_24 {dimension_numbers = #tpu.dot_dimension_numbers<[2], [2], [1], [1], [0, 0, 0, 1, 1, 1], [0], [0]>} : vector<2x8x8xbf16>, vector<2x8x8xbf16>, vector<2x8x8xf32> -> vector<2x8x8xf32>
    "tpu.trace_stop"() : () -> ()
    %75 = arith.addf %74, %37 : vector<2x8x8xf32>
    %cst_25 = arith.constant dense<0xFF800000> : vector<2x8xf32>
    %76 = vector.multi_reduction <maximumf>, %75, %cst_25 [2] : vector<2x8x8xf32> to vector<2x8xf32>
    %77 = vector.shape_cast %76 : vector<2x8xf32> to vector<2x8x1xf32>
    %78 = vector.broadcast %77 : vector<2x8x1xf32> to vector<2x8x8xf32>
    %79 = arith.subf %75, %78 : vector<2x8x8xf32>
    %80 = math.exp %79 : vector<2x8x8xf32>
    %cst_26 = arith.constant dense<0.000000e+00> : vector<2x8xf32>
    %81 = vector.multi_reduction <add>, %80, %cst_26 [2] : vector<2x8x8xf32> to vector<2x8xf32>
    %82 = vector.shape_cast %81 : vector<2x8xf32> to vector<2x8x1xf32>
    %83 = arith.truncf %80 : vector<2x8x8xf32> to vector<2x8x8xbf16>
    %84 = arith.truncf %71 : vector<2x8x8xf32> to vector<2x8x8xbf16>
    "tpu.trace_start"() <{level = 10 : i32, message = "bqk,bkd->bqd"}> : () -> ()
    %cst_27 = arith.constant dense<0.000000e+00> : vector<2x8x8xf32>
    %85 = tpu.matmul %83, %84, %cst_27 {dimension_numbers = #tpu.dot_dimension_numbers<[2], [1], [1], [2], [0, 0, 0, 1, 1, 2], [0], [0]>} : vector<2x8x8xbf16>, vector<2x8x8xbf16>, vector<2x8x8xf32> -> vector<2x8x8xf32>
    "tpu.trace_stop"() : () -> ()
    %86 = tpu.reciprocal %82 {approx = true} : vector<2x8x1xf32> -> vector<2x8x1xf32>
    %87 = vector.broadcast %86 : vector<2x8x1xf32> to vector<2x8x8xf32>
    %88 = arith.mulf %85, %87 : vector<2x8x8xf32>
    %89 = vector.shape_cast %88 : vector<2x8x8xf32> to vector<16x8xf32>
    %90 = vector.extract_strided_slice %33 {offsets = [0, 16], sizes = [16, 8], strides = [1, 1]} : vector<16x96xf32> to vector<16x8xf32>
    %cst_28 = arith.constant 0.353553385 : f32
    %91 = vector.broadcast %cst_28 : f32 to vector<16x8xf32>
    %92 = arith.mulf %90, %91 : vector<16x8xf32>
    %93 = vector.shape_cast %92 : vector<16x8xf32> to vector<2x8x8xf32>
    %94 = vector.extract_strided_slice %33 {offsets = [0, 48], sizes = [16, 8], strides = [1, 1]} : vector<16x96xf32> to vector<16x8xf32>
    %95 = vector.shape_cast %94 : vector<16x8xf32> to vector<2x8x8xf32>
    %96 = vector.extract_strided_slice %33 {offsets = [0, 80], sizes = [16, 8], strides = [1, 1]} : vector<16x96xf32> to vector<16x8xf32>
    %97 = vector.shape_cast %96 : vector<16x8xf32> to vector<2x8x8xf32>
    %98 = arith.truncf %93 : vector<2x8x8xf32> to vector<2x8x8xbf16>
    %99 = arith.truncf %95 : vector<2x8x8xf32> to vector<2x8x8xbf16>
    "tpu.trace_start"() <{level = 10 : i32, message = "bqd,bkd->bqk"}> : () -> ()
    %cst_29 = arith.constant dense<0.000000e+00> : vector<2x8x8xf32>
    %100 = tpu.matmul %98, %99, %cst_29 {dimension_numbers = #tpu.dot_dimension_numbers<[2], [2], [1], [1], [0, 0, 0, 1, 1, 1], [0], [0]>} : vector<2x8x8xbf16>, vector<2x8x8xbf16>, vector<2x8x8xf32> -> vector<2x8x8xf32>
    "tpu.trace_stop"() : () -> ()
    %101 = arith.addf %100, %37 : vector<2x8x8xf32>
    %cst_30 = arith.constant dense<0xFF800000> : vector<2x8xf32>
    %102 = vector.multi_reduction <maximumf>, %101, %cst_30 [2] : vector<2x8x8xf32> to vector<2x8xf32>
    %103 = vector.shape_cast %102 : vector<2x8xf32> to vector<2x8x1xf32>
    %104 = vector.broadcast %103 : vector<2x8x1xf32> to vector<2x8x8xf32>
    %105 = arith.subf %101, %104 : vector<2x8x8xf32>
    %106 = math.exp %105 : vector<2x8x8xf32>
    %cst_31 = arith.constant dense<0.000000e+00> : vector<2x8xf32>
    %107 = vector.multi_reduction <add>, %106, %cst_31 [2] : vector<2x8x8xf32> to vector<2x8xf32>
    %108 = vector.shape_cast %107 : vector<2x8xf32> to vector<2x8x1xf32>
    %109 = arith.truncf %106 : vector<2x8x8xf32> to vector<2x8x8xbf16>
    %110 = arith.truncf %97 : vector<2x8x8xf32> to vector<2x8x8xbf16>
    "tpu.trace_start"() <{level = 10 : i32, message = "bqk,bkd->bqd"}> : () -> ()
    %cst_32 = arith.constant dense<0.000000e+00> : vector<2x8x8xf32>
    %111 = tpu.matmul %109, %110, %cst_32 {dimension_numbers = #tpu.dot_dimension_numbers<[2], [1], [1], [2], [0, 0, 0, 1, 1, 2], [0], [0]>} : vector<2x8x8xbf16>, vector<2x8x8xbf16>, vector<2x8x8xf32> -> vector<2x8x8xf32>
    "tpu.trace_stop"() : () -> ()
    %112 = tpu.reciprocal %108 {approx = true} : vector<2x8x1xf32> -> vector<2x8x1xf32>
    %113 = vector.broadcast %112 : vector<2x8x1xf32> to vector<2x8x8xf32>
    %114 = arith.mulf %111, %113 : vector<2x8x8xf32>
    %115 = vector.shape_cast %114 : vector<2x8x8xf32> to vector<16x8xf32>
    %116 = vector.extract_strided_slice %33 {offsets = [0, 24], sizes = [16, 8], strides = [1, 1]} : vector<16x96xf32> to vector<16x8xf32>
    %cst_33 = arith.constant 0.353553385 : f32
    %117 = vector.broadcast %cst_33 : f32 to vector<16x8xf32>
    %118 = arith.mulf %116, %117 : vector<16x8xf32>
    %119 = vector.shape_cast %118 : vector<16x8xf32> to vector<2x8x8xf32>
    %120 = vector.extract_strided_slice %33 {offsets = [0, 56], sizes = [16, 8], strides = [1, 1]} : vector<16x96xf32> to vector<16x8xf32>
    %121 = vector.shape_cast %120 : vector<16x8xf32> to vector<2x8x8xf32>
    %122 = vector.extract_strided_slice %33 {offsets = [0, 88], sizes = [16, 8], strides = [1, 1]} : vector<16x96xf32> to vector<16x8xf32>
    %123 = vector.shape_cast %122 : vector<16x8xf32> to vector<2x8x8xf32>
    %124 = arith.truncf %119 : vector<2x8x8xf32> to vector<2x8x8xbf16>
    %125 = arith.truncf %121 : vector<2x8x8xf32> to vector<2x8x8xbf16>
    "tpu.trace_start"() <{level = 10 : i32, message = "bqd,bkd->bqk"}> : () -> ()
    %cst_34 = arith.constant dense<0.000000e+00> : vector<2x8x8xf32>
    %126 = tpu.matmul %124, %125, %cst_34 {dimension_numbers = #tpu.dot_dimension_numbers<[2], [2], [1], [1], [0, 0, 0, 1, 1, 1], [0], [0]>} : vector<2x8x8xbf16>, vector<2x8x8xbf16>, vector<2x8x8xf32> -> vector<2x8x8xf32>
    "tpu.trace_stop"() : () -> ()
    %127 = arith.addf %126, %37 : vector<2x8x8xf32>
    %cst_35 = arith.constant dense<0xFF800000> : vector<2x8xf32>
    %128 = vector.multi_reduction <maximumf>, %127, %cst_35 [2] : vector<2x8x8xf32> to vector<2x8xf32>
    %129 = vector.shape_cast %128 : vector<2x8xf32> to vector<2x8x1xf32>
    %130 = vector.broadcast %129 : vector<2x8x1xf32> to vector<2x8x8xf32>
    %131 = arith.subf %127, %130 : vector<2x8x8xf32>
    %132 = math.exp %131 : vector<2x8x8xf32>
    %cst_36 = arith.constant dense<0.000000e+00> : vector<2x8xf32>
    %133 = vector.multi_reduction <add>, %132, %cst_36 [2] : vector<2x8x8xf32> to vector<2x8xf32>
    %134 = vector.shape_cast %133 : vector<2x8xf32> to vector<2x8x1xf32>
    %135 = arith.truncf %132 : vector<2x8x8xf32> to vector<2x8x8xbf16>
    %136 = arith.truncf %123 : vector<2x8x8xf32> to vector<2x8x8xbf16>
    "tpu.trace_start"() <{level = 10 : i32, message = "bqk,bkd->bqd"}> : () -> ()
    %cst_37 = arith.constant dense<0.000000e+00> : vector<2x8x8xf32>
    %137 = tpu.matmul %135, %136, %cst_37 {dimension_numbers = #tpu.dot_dimension_numbers<[2], [1], [1], [2], [0, 0, 0, 1, 1, 2], [0], [0]>} : vector<2x8x8xbf16>, vector<2x8x8xbf16>, vector<2x8x8xf32> -> vector<2x8x8xf32>
    "tpu.trace_stop"() : () -> ()
    %138 = tpu.reciprocal %134 {approx = true} : vector<2x8x1xf32> -> vector<2x8x1xf32>
    %139 = vector.broadcast %138 : vector<2x8x1xf32> to vector<2x8x8xf32>
    %140 = arith.mulf %137, %139 : vector<2x8x8xf32>
    %141 = vector.shape_cast %140 : vector<2x8x8xf32> to vector<16x8xf32>
    %142 = tpu.concatenate %63, %89, %115, %141 in 1 : vector<16x8xf32>, vector<16x8xf32>, vector<16x8xf32>, vector<16x8xf32> -> vector<16x32xf32>
    %143 = arith.truncf %142 : vector<16x32xf32> to vector<16x32xbf16>
    %c0_38 = arith.constant 0 : index
    %c0_39 = arith.constant 0 : index
    %c0_40 = arith.constant 0 : index
    %144 = vector.load %arg7[%c0_38, %c0_39, %c0_40] : memref<1x32x32xbf16, #tpu.memory_space<vmem>>, vector<1x32x32xbf16>
    %145 = vector.shape_cast %144 : vector<1x32x32xbf16> to vector<32x32xbf16>
    %cst_41 = arith.constant dense<0.000000e+00> : vector<16x32xf32>
    %146 = tpu.matmul %143, %145, %cst_41 {dimension_numbers = #tpu.dot_dimension_numbers<[1], [0], [0], [1], [0, 0, 1, 1], [], []>} : vector<16x32xbf16>, vector<32x32xbf16>, vector<16x32xf32> -> vector<16x32xf32>
    %c0_42 = arith.constant 0 : index
    %c0_43 = arith.constant 0 : index
    %c0_44 = arith.constant 0 : index
    %147 = vector.load %arg8[%c0_42, %c0_43, %c0_44] : memref<1x1x32xf32, #tpu.memory_space<vmem>>, vector<1x1x32xf32>
    %148 = vector.shape_cast %147 : vector<1x1x32xf32> to vector<1x32xf32>
    %149 = vector.broadcast %148 : vector<1x32xf32> to vector<16x32xf32>
    %150 = arith.addf %146, %149 : vector<16x32xf32>
    %151 = arith.addf %3, %150 : vector<16x32xf32>
    %c0_45 = arith.constant 0 : index
    %c0_46 = arith.constant 0 : index
    %c0_47 = arith.constant 0 : index
    %152 = vector.load %arg9[%c0_45, %c0_46, %c0_47] : memref<1x1x32xf32, #tpu.memory_space<vmem>>, vector<1x1x32xf32>
    %153 = vector.shape_cast %152 : vector<1x1x32xf32> to vector<1x32xf32>
    %c0_48 = arith.constant 0 : index
    %c0_49 = arith.constant 0 : index
    %c0_50 = arith.constant 0 : index
    %154 = vector.load %arg10[%c0_48, %c0_49, %c0_50] : memref<1x1x32xf32, #tpu.memory_space<vmem>>, vector<1x1x32xf32>
    %155 = vector.shape_cast %154 : vector<1x1x32xf32> to vector<1x32xf32>
    %cst_51 = arith.constant dense<0.000000e+00> : vector<16xf32>
    %156 = vector.multi_reduction <add>, %151, %cst_51 [1] : vector<16x32xf32> to vector<16xf32>
    %157 = vector.shape_cast %156 : vector<16xf32> to vector<16x1xf32>
    %cst_52 = arith.constant 3.200000e+01 : f32
    %158 = vector.broadcast %cst_52 : f32 to vector<16x1xf32>
    %159 = arith.divf %157, %158 : vector<16x1xf32>
    %160 = vector.broadcast %159 : vector<16x1xf32> to vector<16x32xf32>
    %161 = arith.subf %151, %160 : vector<16x32xf32>
    %162 = arith.mulf %161, %161 : vector<16x32xf32>
    %cst_53 = arith.constant dense<0.000000e+00> : vector<16xf32>
    %163 = vector.multi_reduction <add>, %162, %cst_53 [1] : vector<16x32xf32> to vector<16xf32>
    %164 = vector.shape_cast %163 : vector<16xf32> to vector<16x1xf32>
    %cst_54 = arith.constant 3.200000e+01 : f32
    %165 = vector.broadcast %cst_54 : f32 to vector<16x1xf32>
    %166 = arith.divf %164, %165 : vector<16x1xf32>
    %167 = vector.broadcast %159 : vector<16x1xf32> to vector<16x32xf32>
    %168 = arith.subf %151, %167 : vector<16x32xf32>
    %cst_55 = arith.constant 9.99999974E-6 : f32
    %169 = vector.broadcast %cst_55 : f32 to vector<16x1xf32>
    %170 = arith.addf %166, %169 : vector<16x1xf32>
    %171 = math.rsqrt %170 : vector<16x1xf32>
    %172 = vector.broadcast %171 : vector<16x1xf32> to vector<16x32xf32>
    %173 = arith.mulf %168, %172 : vector<16x32xf32>
    %174 = vector.broadcast %153 : vector<1x32xf32> to vector<16x32xf32>
    %175 = arith.mulf %173, %174 : vector<16x32xf32>
    %176 = vector.broadcast %155 : vector<1x32xf32> to vector<16x32xf32>
    %177 = arith.addf %175, %176 : vector<16x32xf32>
    %178 = arith.truncf %177 : vector<16x32xf32> to vector<16x32xbf16>
    %c0_56 = arith.constant 0 : index
    %c0_57 = arith.constant 0 : index
    %c0_58 = arith.constant 0 : index
    %179 = vector.load %arg11[%c0_56, %c0_57, %c0_58] : memref<1x32x128xbf16, #tpu.memory_space<vmem>>, vector<1x32x128xbf16>
    %180 = vector.shape_cast %179 : vector<1x32x128xbf16> to vector<32x128xbf16>
    %cst_59 = arith.constant dense<0.000000e+00> : vector<16x128xf32>
    %181 = tpu.matmul %178, %180, %cst_59 {dimension_numbers = #tpu.dot_dimension_numbers<[1], [0], [0], [1], [0, 0, 1, 1], [], []>} : vector<16x32xbf16>, vector<32x128xbf16>, vector<16x128xf32> -> vector<16x128xf32>
    %c0_60 = arith.constant 0 : index
    %c0_61 = arith.constant 0 : index
    %c0_62 = arith.constant 0 : index
    %182 = vector.load %arg12[%c0_60, %c0_61, %c0_62] : memref<1x1x128xf32, #tpu.memory_space<vmem>>, vector<1x1x128xf32>
    %183 = vector.shape_cast %182 : vector<1x1x128xf32> to vector<1x128xf32>
    %184 = vector.broadcast %183 : vector<1x128xf32> to vector<16x128xf32>
    %185 = arith.addf %181, %184 : vector<16x128xf32>
    %cst_63 = arith.constant 0.000000e+00 : f32
    %186 = vector.broadcast %cst_63 : f32 to vector<16x128xf32>
    %187 = arith.maximumf %185, %186 : vector<16x128xf32>
    %188 = arith.truncf %187 : vector<16x128xf32> to vector<16x128xbf16>
    %c0_64 = arith.constant 0 : index
    %c0_65 = arith.constant 0 : index
    %c0_66 = arith.constant 0 : index
    %189 = vector.load %arg13[%c0_64, %c0_65, %c0_66] : memref<1x128x32xbf16, #tpu.memory_space<vmem>>, vector<1x128x32xbf16>
    %190 = vector.shape_cast %189 : vector<1x128x32xbf16> to vector<128x32xbf16>
    %cst_67 = arith.constant dense<0.000000e+00> : vector<16x32xf32>
    %191 = tpu.matmul %188, %190, %cst_67 {dimension_numbers = #tpu.dot_dimension_numbers<[1], [0], [0], [1], [0, 0, 1, 1], [], []>} : vector<16x128xbf16>, vector<128x32xbf16>, vector<16x32xf32> -> vector<16x32xf32>
    %c0_68 = arith.constant 0 : index
    %c0_69 = arith.constant 0 : index
    %c0_70 = arith.constant 0 : index
    %192 = vector.load %arg14[%c0_68, %c0_69, %c0_70] : memref<1x1x32xf32, #tpu.memory_space<vmem>>, vector<1x1x32xf32>
    %193 = vector.shape_cast %192 : vector<1x1x32xf32> to vector<1x32xf32>
    %194 = vector.broadcast %193 : vector<1x32xf32> to vector<16x32xf32>
    %195 = arith.addf %191, %194 : vector<16x32xf32>
    %196 = arith.addf %151, %195 : vector<16x32xf32>
    %c0_71 = arith.constant 0 : index
    %c0_72 = arith.constant 0 : index
    %197 = vector.load %arg15[%c0_71, %c0_72] : memref<16x32xf32, #tpu.memory_space<vmem>>, vector<16x32xf32>
    tpu.vector_store %arg15[%c0_71, %c0_72], %196 {strides = array<i32>} : memref<16x32xf32, #tpu.memory_space<vmem>>, vector<16x32xf32>,
    return
  }
  func.func @transform_0(%arg0: i32, %arg1: i32) -> (i32, i32) {
    %c0_i32 = arith.constant 0 : i32
    %c0_i32_0 = arith.constant 0 : i32
    return %arg0, %c0_i32 : i32, i32
  }
  func.func @transform_1(%arg0: i32, %arg1: i32) -> (i32, i32) {
    %c0_i32 = arith.constant 0 : i32
    %c0_i32_0 = arith.constant 0 : i32
    %c0_i32_1 = arith.constant 0 : i32
    return %c0_i32, %c0_i32_0 : i32, i32
  }
  func.func @transform_2(%arg0: i32, %arg1: i32) -> (i32, i32, i32) {
    %c0_i32 = arith.constant 0 : i32
    %c0_i32_0 = arith.constant 0 : i32
    %c0_i32_1 = arith.constant 0 : i32
    return %arg1, %c0_i32, %c0_i32_0 : i32, i32, i32
  }
  func.func @transform_3(%arg0: i32, %arg1: i32) -> (i32, i32, i32) {
    %c0_i32 = arith.constant 0 : i32
    %c0_i32_0 = arith.constant 0 : i32
    %c0_i32_1 = arith.constant 0 : i32
    return %arg1, %c0_i32, %c0_i32_0 : i32, i32, i32
  }
  func.func @transform_4(%arg0: i32, %arg1: i32) -> (i32, i32, i32) {
    %c0_i32 = arith.constant 0 : i32
    %c0_i32_0 = arith.constant 0 : i32
    %c0_i32_1 = arith.constant 0 : i32
    return %arg1, %c0_i32, %c0_i32_0 : i32, i32, i32
  }
  func.func @transform_5(%arg0: i32, %arg1: i32) -> (i32, i32, i32) {
    %c0_i32 = arith.constant 0 : i32
    %c0_i32_0 = arith.constant 0 : i32
    %c0_i32_1 = arith.constant 0 : i32
    return %arg1, %c0_i32, %c0_i32_0 : i32, i32, i32
  }
  func.func @transform_6(%arg0: i32, %arg1: i32) -> (i32, i32, i32) {
    %c0_i32 = arith.constant 0 : i32
    %c0_i32_0 = arith.constant 0 : i32
    %c0_i32_1 = arith.constant 0 : i32
    return %arg1, %c0_i32, %c0_i32_0 : i32, i32, i32
  }
  func.func @transform_7(%arg0: i32, %arg1: i32) -> (i32, i32, i32) {
    %c0_i32 = arith.constant 0 : i32
    %c0_i32_0 = arith.constant 0 : i32
    %c0_i32_1 = arith.constant 0 : i32
    return %arg1, %c0_i32, %c0_i32_0 : i32, i32, i32
  }
  func.func @transform_8(%arg0: i32, %arg1: i32) -> (i32, i32, i32) {
    %c0_i32 = arith.constant 0 : i32
    %c0_i32_0 = arith.constant 0 : i32
    %c0_i32_1 = arith.constant 0 : i32
    return %arg1, %c0_i32, %c0_i32_0 : i32, i32, i32
  }
  func.func @transform_9(%arg0: i32, %arg1: i32) -> (i32, i32, i32) {
    %c0_i32 = arith.constant 0 : i32
    %c0_i32_0 = arith.constant 0 : i32
    %c0_i32_1 = arith.constant 0 : i32
    return %arg1, %c0_i32, %c0_i32_0 : i32, i32, i32
  }
  func.func @transform_10(%arg0: i32, %arg1: i32) -> (i32, i32, i32) {
    %c0_i32 = arith.constant 0 : i32
    %c0_i32_0 = arith.constant 0 : i32
    %c0_i32_1 = arith.constant 0 : i32
    return %arg1, %c0_i32, %c0_i32_0 : i32, i32, i32
  }
  func.func @transform_11(%arg0: i32, %arg1: i32) -> (i32, i32, i32) {
    %c0_i32 = arith.constant 0 : i32
    %c0_i32_0 = arith.constant 0 : i32
    %c0_i32_1 = arith.constant 0 : i32
    return %arg1, %c0_i32, %c0_i32_0 : i32, i32, i32
  }
  func.func @transform_12(%arg0: i32, %arg1: i32) -> (i32, i32, i32) {
    %c0_i32 = arith.constant 0 : i32
    %c0_i32_0 = arith.constant 0 : i32
    %c0_i32_1 = arith.constant 0 : i32
    return %arg1, %c0_i32, %c0_i32_0 : i32, i32, i32
  }
  func.func @transform_13(%arg0: i32, %arg1: i32) -> (i32, i32) {
    %c0_i32 = arith.constant 0 : i32
    %c0_i32_0 = arith.constant 0 : i32
    return %arg0, %c0_i32 : i32, i32
  }
}

</mosaic_0001>

<llo_original>
// kernel: tpu_custom_call.1
$region0: #{tpu_custom_call.1}
  #allocation0 [shape = 'u32[]', space=smem, size = 0x4, offset = 0x4, fixed_abs, tag = 'smem constant byte address 0x4 - core index']
  #allocation1 [shape = 'u32[144,128]{1,0:T(1,128)}', space=vmem, size = 0x12000, scoped, tag = 'internal scratch']
  %s0 = inlined_call_operand.hbm [shape: f32[16,32], index: 0, kind: input, shape index: {}, may-alias: {0,13}]
  %s1 = inlined_call_operand.hbm [shape: f32[8,8], index: 1, kind: input, shape index: {}]
  %s2 = inlined_call_operand.hbm [shape: f32[2,1,32], index: 2, kind: input, shape index: {}]
  %s3 = inlined_call_operand.hbm [shape: f32[2,1,32], index: 3, kind: input, shape index: {}]
  %s4 = inlined_call_operand.hbm [shape: bf16[2,32,96], index: 4, kind: input, shape index: {}]
  %s5 = inlined_call_operand.hbm [shape: bf16[2,32,32], index: 5, kind: input, shape index: {}]
  %s6 = inlined_call_operand.hbm [shape: f32[2,1,32], index: 6, kind: input, shape index: {}]
  %s7 = inlined_call_operand.hbm [shape: f32[2,1,32], index: 7, kind: input, shape index: {}]
  %s8 = inlined_call_operand.hbm [shape: f32[2,1,32], index: 8, kind: input, shape index: {}]
  %s9 = inlined_call_operand.hbm [shape: bf16[2,32,128], index: 9, kind: input, shape index: {}]
  %s10 = inlined_call_operand.hbm [shape: f32[2,1,128], index: 10, kind: input, shape index: {}]
  %s11 = inlined_call_operand.hbm [shape: bf16[2,128,32], index: 11, kind: input, shape index: {}]
  %s12 = inlined_call_operand.hbm [shape: f32[2,1,32], index: 12, kind: input, shape index: {}]
  %s13 = inlined_call_operand.hbm [shape: f32[16,32], index: 13, kind: output, shape index: {}, may-alias: {0,13}]
  %s14 = sld [smem:[#allocation0]]
  $region141: #{tpu_custom_call.1} parent=0
    _
  %s16 = ssub.s32 1, %s14
  %s17 = scalar_select 0, %s16, %s14
  $region1: #{tpu_custom_call.1} parent=0
    #allocation2 [shape = 'u8[8192]{0}', space=vmem, size = 0x2000, scoped, tag = 'input window, operand 0, single buffered']
    #allocation3 [shape = 's32[2]{0}', space=sflag, size = 0x8, scoped, tag = 'scoped memory for tpu_custom_call.1']
    #allocation4 [shape = 's32[2]{0}', space=sflag, size = 0x8, scoped, tag = 'scoped memory for tpu_custom_call.1']
    #allocation5 [shape = 'u8[4096]{0}', space=vmem, size = 0x1000, scoped, tag = 'input window, operand 1, single buffered']
    #allocation6 [shape = 's32[1]{0}', space=sflag, size = 0x4, scoped, tag = 'scoped memory for tpu_custom_call.1']
    #allocation7 [shape = 'u8[1024]{0}', space=vmem, size = 0x400, scoped, tag = 'input window, operand 2']
    #allocation8 [shape = 'u8[1024]{0}', space=vmem, size = 0x400, scoped, tag = 'input window, operand 3']
    #allocation9 [shape = 'u8[16384]{0}', space=vmem, size = 0x4000, scoped, tag = 'input window, operand 4']
    #allocation10 [shape = 'u8[16384]{0}', space=vmem, size = 0x4000, scoped, tag = 'input window, operand 5']
    #allocation11 [shape = 'u8[1024]{0}', space=vmem, size = 0x400, scoped, tag = 'input window, operand 6']
    #allocation12 [shape = 'u8[1024]{0}', space=vmem, size = 0x400, scoped, tag = 'input window, operand 7']
    #allocation13 [shape = 'u8[1024]{0}', space=vmem, size = 0x400, scoped, tag = 'input window, operand 8']
    #allocation14 [shape = 'u8[16384]{0}', space=vmem, size = 0x4000, scoped, tag = 'input window, operand 9']
    #allocation15 [shape = 'u8[1024]{0}', space=vmem, size = 0x400, scoped, tag = 'input window, operand 10']
    #allocation16 [shape = 'u8[65536]{0}', space=vmem, size = 0x10000, scoped, tag = 'input window, operand 11']
    #allocation17 [shape = 'u8[1024]{0}', space=vmem, size = 0x400, scoped, tag = 'input window, operand 12']
    #allocation18 [shape = 'u8[8192]{0}', space=vmem, size = 0x2000, scoped, tag = 'output window, operand 0, single buffered']
    %18 = vsyncpa [#allocation3], 0
    %19 = vsyncpa [#allocation6], 0
    %20 = vsyncpa [#allocation4], 0
    loop: start=0, step=1, limit=4
    $region2: #{tpu_custom_call.1} parent=1 // loop_pre_header
      _
    $region3: #{tpu_custom_call.1} parent=1 // loop_header
      %s22 = sphi 0, %s26
      %p23 = scmp.ge.s32.totalorder %s22, 4
      %s29 = sphi 0, %s41
      %s30 = sphi 0, %s37
      %s31 = sphi 0, %s29
      %s32 = sphi 0, %s30
      %s33 = sphi 0, %s31
      %s34 = sphi 0, %s32
      %s44 = sphi 0, %s46
      %s47 = sphi 0, %s44
      %s48 = sphi 0, %s47
      %s64 = sphi 0, %s48
      %s68 = sphi 0, %s68
      %s70 = sphi 0, %s68
      %s71 = sphi 0, %s70
      %s85 = sphi 0, %s71
      %s91 = sphi 0, %s93
      %s94 = sphi 0, %s91
      %s95 = sphi 0, %s94
      %s111 = sphi 0, %s95
      %s117 = sphi 0, %s119
      %s120 = sphi 0, %s117
      %s121 = sphi 0, %s120
      %s137 = sphi 0, %s121
      %s143 = sphi 0, %s145
      %s146 = sphi 0, %s143
      %s147 = sphi 0, %s146
      %s163 = sphi 0, %s147
      %s169 = sphi 0, %s171
      %s172 = sphi 0, %s169
      %s173 = sphi 0, %s172
      %s189 = sphi 0, %s173
      %s195 = sphi 0, %s197
      %s198 = sphi 0, %s195
      %s199 = sphi 0, %s198
      %s215 = sphi 0, %s199
      %s221 = sphi 0, %s223
      %s224 = sphi 0, %s221
      %s225 = sphi 0, %s224
      %s241 = sphi 0, %s225
      %s247 = sphi 0, %s249
      %s250 = sphi 0, %s247
      %s251 = sphi 0, %s250
      %s267 = sphi 0, %s251
      %s273 = sphi 0, %s275
      %s276 = sphi 0, %s273
      %s277 = sphi 0, %s276
      %s293 = sphi 0, %s277
      %s299 = sphi 0, %s301
      %s302 = sphi 0, %s299
      %s303 = sphi 0, %s302
      %s319 = sphi 0, %s303
      %s325 = sphi 0, %s327
      %s328 = sphi 0, %s325
      %s329 = sphi 0, %s328
      %s345 = sphi 0, %s329
      %s351 = sphi 0, %s353
      %s354 = sphi 0, %s351
      %s355 = sphi 0, %s354
      %s371 = sphi 0, %s355
      %s377 = sphi 0, %s379
      %s380 = sphi 0, %s377
      %s381 = sphi 0, %s380
      %s397 = sphi 0, %s381
    $region4: #{tpu_custom_call.1} parent=1 // loop_header_branch
      %25 = sbr.rel (%p23) target = $region8
    $region5: #{tpu_custom_call.1} parent=1 // loop_body
      %s27 = ssub.s32 %s22, 1
      %s28 = ssub.s32 %s22, 2
      %s35 = sadd.s32 1, %s30
      %p36 = scmp.ge.s32.totalorder %s35, 2
      %s37 = scalar_select %p36, 0, %s35
      %s38 = sadd.s32 1, %s29
      %s39 = scalar_select %p36, %s38, %s29
      %p40 = scmp.ge.s32.totalorder %s39, 1
      %s41 = scalar_select %p40, 0, %s39
      %s42 = ssub.s32 %s29, %s41
      %p43 = scmp.eq.s32.totalorder %s42, 0
      %s45 = sadd.s32 %s44, 1
      %s46 = scalar_select %p43, %s44, %s45
      %p49 = pneg %p43
      %p50 = scmp.eq.s32.totalorder %s22, 1
      %p51 = por %p49, %p50
      %p52 = scmp.ne.s32.totalorder %s44, %s47
      %p53 = scmp.eq.s32.totalorder %s22, 0
      %p54 = por %p52, %p53
      %p55 = scmp.ne.s32.totalorder %s44, %s47
      %p56 = scmp.eq.s32.totalorder %s27, 1
      %p57 = por %p55, %p56
      %p58 = scmp.ne.s32.totalorder %s47, %s48
      %p59 = scmp.eq.s32.totalorder %s27, 0
      %p60 = por %p58, %p59
      %p61 = scmp.ne.s32.totalorder %s47, %s48
      %p62 = scmp.eq.s32.totalorder %s28, 1
      %p63 = por %p61, %p62
      %p65 = scmp.ne.s32.totalorder %s48, %s64
      %p66 = scmp.eq.s32.totalorder %s28, 0
      %p67 = por %p65, %p66
      %s69 = sadd.s32 %s68, 1
      %p72 = scmp.eq.s32.totalorder %s22, 1
      %p73 = scmp.ne.s32.totalorder %s68, %s70
      %p74 = scmp.eq.s32.totalorder %s22, 0
      %p75 = por %p73, %p74
      %p76 = scmp.ne.s32.totalorder %s68, %s70
      %p77 = scmp.eq.s32.totalorder %s27, 1
      %p78 = por %p76, %p77
      %p79 = scmp.ne.s32.totalorder %s70, %s71
      %p80 = scmp.eq.s32.totalorder %s27, 0
      %p81 = por %p79, %p80
      %p82 = scmp.ne.s32.totalorder %s70, %s71
      %p83 = scmp.eq.s32.totalorder %s28, 1
      %p84 = por %p82, %p83
      %p86 = scmp.ne.s32.totalorder %s71, %s85
      %p87 = scmp.eq.s32.totalorder %s28, 0
      %p88 = por %p86, %p87
      %s89 = ssub.s32 %s30, %s37
      %p90 = scmp.eq.s32.totalorder %s89, 0
      %s92 = sadd.s32 %s91, 1
      %s93 = scalar_select %p90, %s91, %s92
      %p96 = pneg %p90
      %p97 = scmp.eq.s32.totalorder %s22, 1
      %p98 = por %p96, %p97
      %p99 = scmp.ne.s32.totalorder %s91, %s94
      %p100 = scmp.eq.s32.totalorder %s22, 0
      %p101 = por %p99, %p100
      %p102 = scmp.ne.s32.totalorder %s91, %s94
      %p103 = scmp.eq.s32.totalorder %s27, 1
      %p104 = por %p102, %p103
      %p105 = scmp.ne.s32.totalorder %s94, %s95
      %p106 = scmp.eq.s32.totalorder %s27, 0
      %p107 = por %p105, %p106
      %p108 = scmp.ne.s32.totalorder %s94, %s95
      %p109 = scmp.eq.s32.totalorder %s28, 1
      %p110 = por %p108, %p109
      %p112 = scmp.ne.s32.totalorder %s95, %s111
      %p113 = scmp.eq.s32.totalorder %s28, 0
      %p114 = por %p112, %p113
      %s115 = ssub.s32 %s30, %s37
      %p116 = scmp.eq.s32.totalorder %s115, 0
      %s118 = sadd.s32 %s117, 1
      %s119 = scalar_select %p116, %s117, %s118
      %p122 = pneg %p116
      %p123 = scmp.eq.s32.totalorder %s22, 1
      %p124 = por %p122, %p123
      %p125 = scmp.ne.s32.totalorder %s117, %s120
      %p126 = scmp.eq.s32.totalorder %s22, 0
      %p127 = por %p125, %p126
      %p128 = scmp.ne.s32.totalorder %s117, %s120
      %p129 = scmp.eq.s32.totalorder %s27, 1
      %p130 = por %p128, %p129
      %p131 = scmp.ne.s32.totalorder %s120, %s121
      %p132 = scmp.eq.s32.totalorder %s27, 0
      %p133 = por %p131, %p132
      %p134 = scmp.ne.s32.totalorder %s120, %s121
      %p135 = scmp.eq.s32.totalorder %s28, 1
      %p136 = por %p134, %p135
      %p138 = scmp.ne.s32.totalorder %s121, %s137
      %p139 = scmp.eq.s32.totalorder %s28, 0
      %p140 = por %p138, %p139
      %s141 = ssub.s32 %s30, %s37
      %p142 = scmp.eq.s32.totalorder %s141, 0
      %s144 = sadd.s32 %s143, 1
      %s145 = scalar_select %p142, %s143, %s144
      %p148 = pneg %p142
      %p149 = scmp.eq.s32.totalorder %s22, 1
      %p150 = por %p148, %p149
      %p151 = scmp.ne.s32.totalorder %s143, %s146
      %p152 = scmp.eq.s32.totalorder %s22, 0
      %p153 = por %p151, %p152
      %p154 = scmp.ne.s32.totalorder %s143, %s146
      %p155 = scmp.eq.s32.totalorder %s27, 1
      %p156 = por %p154, %p155
      %p157 = scmp.ne.s32.totalorder %s146, %s147
      %p158 = scmp.eq.s32.totalorder %s27, 0
      %p159 = por %p157, %p158
      %p160 = scmp.ne.s32.totalorder %s146, %s147
      %p161 = scmp.eq.s32.totalorder %s28, 1
      %p162 = por %p160, %p161
      %p164 = scmp.ne.s32.totalorder %s147, %s163
      %p165 = scmp.eq.s32.totalorder %s28, 0
      %p166 = por %p164, %p165
      %s167 = ssub.s32 %s30, %s37
      %p168 = scmp.eq.s32.totalorder %s167, 0
      %s170 = sadd.s32 %s169, 1
      %s171 = scalar_select %p168, %s169, %s170
      %p174 = pneg %p168
      %p175 = scmp.eq.s32.totalorder %s22, 1
      %p176 = por %p174, %p175
      %p177 = scmp.ne.s32.totalorder %s169, %s172
      %p178 = scmp.eq.s32.totalorder %s22, 0
      %p179 = por %p177, %p178
      %p180 = scmp.ne.s32.totalorder %s169, %s172
      %p181 = scmp.eq.s32.totalorder %s27, 1
      %p182 = por %p180, %p181
      %p183 = scmp.ne.s32.totalorder %s172, %s173
      %p184 = scmp.eq.s32.totalorder %s27, 0
      %p185 = por %p183, %p184
      %p186 = scmp.ne.s32.totalorder %s172, %s173
      %p187 = scmp.eq.s32.totalorder %s28, 1
      %p188 = por %p186, %p187
      %p190 = scmp.ne.s32.totalorder %s173, %s189
      %p191 = scmp.eq.s32.totalorder %s28, 0
      %p192 = por %p190, %p191
      %s193 = ssub.s32 %s30, %s37
      %p194 = scmp.eq.s32.totalorder %s193, 0
      %s196 = sadd.s32 %s195, 1
      %s197 = scalar_select %p194, %s195, %s196
      %p200 = pneg %p194
      %p201 = scmp.eq.s32.totalorder %s22, 1
      %p202 = por %p200, %p201
      %p203 = scmp.ne.s32.totalorder %s195, %s198
      %p204 = scmp.eq.s32.totalorder %s22, 0
      %p205 = por %p203, %p204
      %p206 = scmp.ne.s32.totalorder %s195, %s198
      %p207 = scmp.eq.s32.totalorder %s27, 1
      %p208 = por %p206, %p207
      %p209 = scmp.ne.s32.totalorder %s198, %s199
      %p210 = scmp.eq.s32.totalorder %s27, 0
      %p211 = por %p209, %p210
      %p212 = scmp.ne.s32.totalorder %s198, %s199
      %p213 = scmp.eq.s32.totalorder %s28, 1
      %p214 = por %p212, %p213
      %p216 = scmp.ne.s32.totalorder %s199, %s215
      %p217 = scmp.eq.s32.totalorder %s28, 0
      %p218 = por %p216, %p217
      %s219 = ssub.s32 %s30, %s37
      %p220 = scmp.eq.s32.totalorder %s219, 0
      %s222 = sadd.s32 %s221, 1
      %s223 = scalar_select %p220, %s221, %s222
      %p226 = pneg %p220
      %p227 = scmp.eq.s32.totalorder %s22, 1
      %p228 = por %p226, %p227
      %p229 = scmp.ne.s32.totalorder %s221, %s224
      %p230 = scmp.eq.s32.totalorder %s22, 0
      %p231 = por %p229, %p230
      %p232 = scmp.ne.s32.totalorder %s221, %s224
      %p233 = scmp.eq.s32.totalorder %s27, 1
      %p234 = por %p232, %p233
      %p235 = scmp.ne.s32.totalorder %s224, %s225
      %p236 = scmp.eq.s32.totalorder %s27, 0
      %p237 = por %p235, %p236
      %p238 = scmp.ne.s32.totalorder %s224, %s225
      %p239 = scmp.eq.s32.totalorder %s28, 1
      %p240 = por %p238, %p239
      %p242 = scmp.ne.s32.totalorder %s225, %s241
      %p243 = scmp.eq.s32.totalorder %s28, 0
      %p244 = por %p242, %p243
      %s245 = ssub.s32 %s30, %s37
      %p246 = scmp.eq.s32.totalorder %s245, 0
      %s248 = sadd.s32 %s247, 1
      %s249 = scalar_select %p246, %s247, %s248
      %p252 = pneg %p246
      %p253 = scmp.eq.s32.totalorder %s22, 1
      %p254 = por %p252, %p253
      %p255 = scmp.ne.s32.totalorder %s247, %s250
      %p256 = scmp.eq.s32.totalorder %s22, 0
      %p257 = por %p255, %p256
      %p258 = scmp.ne.s32.totalorder %s247, %s250
      %p259 = scmp.eq.s32.totalorder %s27, 1
      %p260 = por %p258, %p259
      %p261 = scmp.ne.s32.totalorder %s250, %s251
      %p262 = scmp.eq.s32.totalorder %s27, 0
      %p263 = por %p261, %p262
      %p264 = scmp.ne.s32.totalorder %s250, %s251
      %p265 = scmp.eq.s32.totalorder %s28, 1
      %p266 = por %p264, %p265
      %p268 = scmp.ne.s32.totalorder %s251, %s267
      %p269 = scmp.eq.s32.totalorder %s28, 0
      %p270 = por %p268, %p269
      %s271 = ssub.s32 %s30, %s37
      %p272 = scmp.eq.s32.totalorder %s271, 0
      %s274 = sadd.s32 %s273, 1
      %s275 = scalar_select %p272, %s273, %s274
      %p278 = pneg %p272
      %p279 = scmp.eq.s32.totalorder %s22, 1
      %p280 = por %p278, %p279
      %p281 = scmp.ne.s32.totalorder %s273, %s276
      %p282 = scmp.eq.s32.totalorder %s22, 0
      %p283 = por %p281, %p282
      %p284 = scmp.ne.s32.totalorder %s273, %s276
      %p285 = scmp.eq.s32.totalorder %s27, 1
      %p286 = por %p284, %p285
      %p287 = scmp.ne.s32.totalorder %s276, %s277
      %p288 = scmp.eq.s32.totalorder %s27, 0
      %p289 = por %p287, %p288
      %p290 = scmp.ne.s32.totalorder %s276, %s277
      %p291 = scmp.eq.s32.totalorder %s28, 1
      %p292 = por %p290, %p291
      %p294 = scmp.ne.s32.totalorder %s277, %s293
      %p295 = scmp.eq.s32.totalorder %s28, 0
      %p296 = por %p294, %p295
      %s297 = ssub.s32 %s30, %s37
      %p298 = scmp.eq.s32.totalorder %s297, 0
      %s300 = sadd.s32 %s299, 1
      %s301 = scalar_select %p298, %s299, %s300
      %p304 = pneg %p298
      %p305 = scmp.eq.s32.totalorder %s22, 1
      %p306 = por %p304, %p305
      %p307 = scmp.ne.s32.totalorder %s299, %s302
      %p308 = scmp.eq.s32.totalorder %s22, 0
      %p309 = por %p307, %p308
      %p310 = scmp.ne.s32.totalorder %s299, %s302
      %p311 = scmp.eq.s32.totalorder %s27, 1
      %p312 = por %p310, %p311
      %p313 = scmp.ne.s32.totalorder %s302, %s303
      %p314 = scmp.eq.s32.totalorder %s27, 0
      %p315 = por %p313, %p314
      %p316 = scmp.ne.s32.totalorder %s302, %s303
      %p317 = scmp.eq.s32.totalorder %s28, 1
      %p318 = por %p316, %p317
      %p320 = scmp.ne.s32.totalorder %s303, %s319
      %p321 = scmp.eq.s32.totalorder %s28, 0
      %p322 = por %p320, %p321
      %s323 = ssub.s32 %s30, %s37
      %p324 = scmp.eq.s32.totalorder %s323, 0
      %s326 = sadd.s32 %s325, 1
      %s327 = scalar_select %p324, %s325, %s326
      %p330 = pneg %p324
      %p331 = scmp.eq.s32.totalorder %s22, 1
      %p332 = por %p330, %p331
      %p333 = scmp.ne.s32.totalorder %s325, %s328
      %p334 = scmp.eq.s32.totalorder %s22, 0
      %p335 = por %p333, %p334
      %p336 = scmp.ne.s32.totalorder %s325, %s328
      %p337 = scmp.eq.s32.totalorder %s27, 1
      %p338 = por %p336, %p337
      %p339 = scmp.ne.s32.totalorder %s328, %s329
      %p340 = scmp.eq.s32.totalorder %s27, 0
      %p341 = por %p339, %p340
      %p342 = scmp.ne.s32.totalorder %s328, %s329
      %p343 = scmp.eq.s32.totalorder %s28, 1
      %p344 = por %p342, %p343
      %p346 = scmp.ne.s32.totalorder %s329, %s345
      %p347 = scmp.eq.s32.totalorder %s28, 0
      %p348 = por %p346, %p347
      %s349 = ssub.s32 %s30, %s37
      %p350 = scmp.eq.s32.totalorder %s349, 0
      %s352 = sadd.s32 %s351, 1
      %s353 = scalar_select %p350, %s351, %s352
      %p356 = pneg %p350
      %p357 = scmp.eq.s32.totalorder %s22, 1
      %p358 = por %p356, %p357
      %p359 = scmp.ne.s32.totalorder %s351, %s354
      %p360 = scmp.eq.s32.totalorder %s22, 0
      %p361 = por %p359, %p360
      %p362 = scmp.ne.s32.totalorder %s351, %s354
      %p363 = scmp.eq.s32.totalorder %s27, 1
      %p364 = por %p362, %p363
      %p365 = scmp.ne.s32.totalorder %s354, %s355
      %p366 = scmp.eq.s32.totalorder %s27, 0
      %p367 = por %p365, %p366
      %p368 = scmp.ne.s32.totalorder %s354, %s355
      %p369 = scmp.eq.s32.totalorder %s28, 1
      %p370 = por %p368, %p369
      %p372 = scmp.ne.s32.totalorder %s355, %s371
      %p373 = scmp.eq.s32.totalorder %s28, 0
      %p374 = por %p372, %p373
      %s375 = ssub.s32 %s29, %s41
      %p376 = scmp.eq.s32.totalorder %s375, 0
      %s378 = sadd.s32 %s377, 1
      %s379 = scalar_select %p376, %s377, %s378
      %p382 = pneg %p376
      %p383 = scmp.eq.s32.totalorder %s22, 1
      %p384 = por %p382, %p383
      %p385 = scmp.ne.s32.totalorder %s377, %s380
      %p386 = scmp.eq.s32.totalorder %s22, 0
      %p387 = por %p385, %p386
      %p388 = scmp.ne.s32.totalorder %s377, %s380
      %p389 = scmp.eq.s32.totalorder %s27, 1
      %p390 = por %p388, %p389
      %p391 = scmp.ne.s32.totalorder %s380, %s381
      %p392 = scmp.eq.s32.totalorder %s27, 0
      %p393 = por %p391, %p392
      %p394 = scmp.ne.s32.totalorder %s380, %s381
      %p395 = scmp.eq.s32.totalorder %s28, 1
      %p396 = por %p394, %p395
      %p398 = scmp.ne.s32.totalorder %s381, %s397
      %p399 = scmp.eq.s32.totalorder %s28, 0
      %p400 = por %p398, %p399
      %p401 = scmp.le.s32.totalorder 1, %s22
      %p402 = scmp.lt.s32.totalorder %s22, 3
      %p403 = pnand %p401, %p402
      %p404 = pneg %p403
      // Predicated region
      $region9: #{tpu_custom_call.1} parent=5 // pred_check
        _
      $region10: #{tpu_custom_call.1} parent=5 // pred_check_branch
        %406 = sbr.rel (%p403) target = $region12
      $region11: #{tpu_custom_call.1} parent=5 // pred_region
        %s407 = ssub.s32 %s22, 1
        // Predicated region
        $region13: #{tpu_custom_call.1} parent=11 // pred_check
          %p408 = pneg %p60
        $region14: #{tpu_custom_call.1} parent=11 // pred_check_branch
          %410 = sbr.rel (%p408) target = $region16
        $region15: #{tpu_custom_call.1} parent=11 // pred_region
          %s411 = smul.u32 2, %s31
          %s413 = ssub.s32 256, 256
          %414 = vsyncadd [#allocation3], %s413
          %s415 = smul.addr %s411, 128
          %s416 = scalar_lea.hbm %s0, %s415
          %s417 = sshll.u32 [#allocation2], 4
          %s418 = int_to_ptr.vmem [resolvable:$true] %s417
          %423 = dma.hbm_to_vmem [thread:$0]  %s416, 256, %s418, [#allocation3], 128, 128, 8
        $region16: #{tpu_custom_call.1} parent=11 // pred_fallthru
          _
        // Predicated region
        $region17: #{tpu_custom_call.1} parent=11 // pred_check
          %p424 = pneg %p81
        $region18: #{tpu_custom_call.1} parent=11 // pred_check_branch
          %426 = sbr.rel (%p424) target = $region20
        $region19: #{tpu_custom_call.1} parent=11 // pred_region
          %s428 = ssub.s32 128, 128
          %429 = vsyncadd [#allocation6], %s428
          %s431 = sshll.u32 [#allocation5], 4
          %s432 = int_to_ptr.vmem [resolvable:$true] %s431
          %434 = dma.hbm_to_vmem [thread:$0]  %s1, 128, %s432, [#allocation6]
        $region20: #{tpu_custom_call.1} parent=11 // pred_fallthru
          _
      $region12: #{tpu_custom_call.1} parent=5 // pred_fallthru
        _
      %p435 = scmp.lt.s32.totalorder %s22, 2
      // Predicated region
      $region21: #{tpu_custom_call.1} parent=5 // pred_check
        %p436 = pneg %p435
      $region22: #{tpu_custom_call.1} parent=5 // pred_check_branch
        %438 = sbr.rel (%p436) target = $region24
      $region23: #{tpu_custom_call.1} parent=5 // pred_region
        // Predicated region
        $region25: #{tpu_custom_call.1} parent=23 // pred_check
          %p439 = pneg %p101
        $region26: #{tpu_custom_call.1} parent=23 // pred_check_branch
          %441 = sbr.rel (%p439) target = $region28
        $region27: #{tpu_custom_call.1} parent=23 // pred_region
          %s442 = sand.u32 %s22, 1
          %s443 = scalar_lea.sflag [#allocation3], %s442
          %s444 = sand.u32 %s91, 1
          %s445 = scalar_lea.vmem [#allocation7], %s444
          %s447 = ssub.s32 16, 16
          %448 = vsyncadd %s443, %s447
          %s449 = smul.addr %s30, 16
          %s450 = scalar_lea.hbm %s2, %s449
          %s452 = sshll.u32 %s445, 4
          %s453 = int_to_ptr.vmem [resolvable:$true] %s452
          %455 = dma.hbm_to_vmem [thread:$0]  %s450, 16, %s453, %s443
        $region28: #{tpu_custom_call.1} parent=23 // pred_fallthru
          _
        // Predicated region
        $region29: #{tpu_custom_call.1} parent=23 // pred_check
          %p456 = pneg %p127
        $region30: #{tpu_custom_call.1} parent=23 // pred_check_branch
          %458 = sbr.rel (%p456) target = $region32
        $region31: #{tpu_custom_call.1} parent=23 // pred_region
          %s459 = sand.u32 %s22, 1
          %s460 = scalar_lea.sflag [#allocation3], %s459
          %s461 = sand.u32 %s117, 1
          %s462 = scalar_lea.vmem [#allocation8], %s461
          %s464 = ssub.s32 16, 16
          %465 = vsyncadd %s460, %s464
          %s466 = smul.addr %s30, 16
          %s467 = scalar_lea.hbm %s3, %s466
          %s469 = sshll.u32 %s462, 4
          %s470 = int_to_ptr.vmem [resolvable:$true] %s469
          %472 = dma.hbm_to_vmem [thread:$0]  %s467, 16, %s470, %s460
        $region32: #{tpu_custom_call.1} parent=23 // pred_fallthru
          _
        // Predicated region
        $region33: #{tpu_custom_call.1} parent=23 // pred_check
          %p473 = pneg %p153
        $region34: #{tpu_custom_call.1} parent=23 // pred_check_branch
          %475 = sbr.rel (%p473) target = $region36
        $region35: #{tpu_custom_call.1} parent=23 // pred_region
          %s476 = sand.u32 %s22, 1
          %s477 = scalar_lea.sflag [#allocation3], %s476
          %s478 = sand.u32 %s143, 1
          %s479 = smul.addr %s478, 16
          %s480 = scalar_lea.vmem [#allocation9], %s479
          %s482 = ssub.s32 256, 256
          %483 = vsyncadd %s477, %s482
          %s484 = smul.addr %s30, 4
          %s485 = smul.addr %s484, 64
          %s486 = scalar_lea.hbm %s4, %s485
          %s487 = sshll.u32 %s480, 4
          %s488 = int_to_ptr.vmem [resolvable:$true] %s487
          %493 = dma.hbm_to_vmem [thread:$0]  %s486, 256, %s488, %s477, 64, 64, 4
        $region36: #{tpu_custom_call.1} parent=23 // pred_fallthru
          _
        // Predicated region
        $region37: #{tpu_custom_call.1} parent=23 // pred_check
          %p494 = pneg %p179
        $region38: #{tpu_custom_call.1} parent=23 // pred_check_branch
          %496 = sbr.rel (%p494) target = $region40
        $region39: #{tpu_custom_call.1} parent=23 // pred_region
          %s497 = sand.u32 %s22, 1
          %s498 = scalar_lea.sflag [#allocation3], %s497
          %s499 = sand.u32 %s169, 1
          %s500 = smul.addr %s499, 16
          %s501 = scalar_lea.vmem [#allocation10], %s500
          %s503 = ssub.s32 256, 256
          %504 = vsyncadd %s498, %s503
          %s505 = smul.addr %s30, 4
          %s506 = smul.addr %s505, 64
          %s507 = scalar_lea.hbm %s5, %s506
          %s508 = sshll.u32 %s501, 4
          %s509 = int_to_ptr.vmem [resolvable:$true] %s508
          %514 = dma.hbm_to_vmem [thread:$0]  %s507, 256, %s509, %s498, 64, 64, 4
        $region40: #{tpu_custom_call.1} parent=23 // pred_fallthru
          _
        // Predicated region
        $region41: #{tpu_custom_call.1} parent=23 // pred_check
          %p515 = pneg %p205
        $region42: #{tpu_custom_call.1} parent=23 // pred_check_branch
          %517 = sbr.rel (%p515) target = $region44
        $region43: #{tpu_custom_call.1} parent=23 // pred_region
          %s518 = sand.u32 %s22, 1
          %s519 = scalar_lea.sflag [#allocation3], %s518
          %s520 = sand.u32 %s195, 1
          %s521 = scalar_lea.vmem [#allocation11], %s520
          %s523 = ssub.s32 16, 16
          %524 = vsyncadd %s519, %s523
          %s525 = smul.addr %s30, 16
          %s526 = scalar_lea.hbm %s6, %s525
          %s528 = sshll.u32 %s521, 4
          %s529 = int_to_ptr.vmem [resolvable:$true] %s528
          %531 = dma.hbm_to_vmem [thread:$0]  %s526, 16, %s529, %s519
        $region44: #{tpu_custom_call.1} parent=23 // pred_fallthru
          _
        // Predicated region
        $region45: #{tpu_custom_call.1} parent=23 // pred_check
          %p532 = pneg %p231
        $region46: #{tpu_custom_call.1} parent=23 // pred_check_branch
          %534 = sbr.rel (%p532) target = $region48
        $region47: #{tpu_custom_call.1} parent=23 // pred_region
          %s535 = sand.u32 %s22, 1
          %s536 = scalar_lea.sflag [#allocation3], %s535
          %s537 = sand.u32 %s221, 1
          %s538 = scalar_lea.vmem [#allocation12], %s537
          %s540 = ssub.s32 16, 16
          %541 = vsyncadd %s536, %s540
          %s542 = smul.addr %s30, 16
          %s543 = scalar_lea.hbm %s7, %s542
          %s545 = sshll.u32 %s538, 4
          %s546 = int_to_ptr.vmem [resolvable:$true] %s545
          %548 = dma.hbm_to_vmem [thread:$0]  %s543, 16, %s546, %s536
        $region48: #{tpu_custom_call.1} parent=23 // pred_fallthru
          _
        // Predicated region
        $region49: #{tpu_custom_call.1} parent=23 // pred_check
          %p549 = pneg %p257
        $region50: #{tpu_custom_call.1} parent=23 // pred_check_branch
          %551 = sbr.rel (%p549) target = $region52
        $region51: #{tpu_custom_call.1} parent=23 // pred_region
          %s552 = sand.u32 %s22, 1
          %s553 = scalar_lea.sflag [#allocation3], %s552
          %s554 = sand.u32 %s247, 1
          %s555 = scalar_lea.vmem [#allocation13], %s554
          %s557 = ssub.s32 16, 16
          %558 = vsyncadd %s553, %s557
          %s559 = smul.addr %s30, 16
          %s560 = scalar_lea.hbm %s8, %s559
          %s562 = sshll.u32 %s555, 4
          %s563 = int_to_ptr.vmem [resolvable:$true] %s562
          %565 = dma.hbm_to_vmem [thread:$0]  %s560, 16, %s563, %s553
        $region52: #{tpu_custom_call.1} parent=23 // pred_fallthru
          _
        // Predicated region
        $region53: #{tpu_custom_call.1} parent=23 // pred_check
          %p566 = pneg %p283
        $region54: #{tpu_custom_call.1} parent=23 // pred_check_branch
          %568 = sbr.rel (%p566) target = $region56
        $region55: #{tpu_custom_call.1} parent=23 // pred_region
          %s569 = sand.u32 %s22, 1
          %s570 = scalar_lea.sflag [#allocation3], %s569
          %s571 = sand.u32 %s273, 1
          %s572 = smul.addr %s571, 16
          %s573 = scalar_lea.vmem [#allocation14], %s572
          %s575 = ssub.s32 256, 256
          %576 = vsyncadd %s570, %s575
          %s577 = smul.addr %s30, 4
          %s578 = smul.addr %s577, 64
          %s579 = scalar_lea.hbm %s9, %s578
          %s580 = sshll.u32 %s573, 4
          %s581 = int_to_ptr.vmem [resolvable:$true] %s580
          %586 = dma.hbm_to_vmem [thread:$0]  %s579, 256, %s581, %s570, 64, 64, 4
        $region56: #{tpu_custom_call.1} parent=23 // pred_fallthru
          _
        // Predicated region
        $region57: #{tpu_custom_call.1} parent=23 // pred_check
          %p587 = pneg %p309
        $region58: #{tpu_custom_call.1} parent=23 // pred_check_branch
          %589 = sbr.rel (%p587) target = $region60
        $region59: #{tpu_custom_call.1} parent=23 // pred_region
          %s590 = sand.u32 %s22, 1
          %s591 = scalar_lea.sflag [#allocation3], %s590
          %s592 = sand.u32 %s299, 1
          %s593 = scalar_lea.vmem [#allocation15], %s592
          %s595 = ssub.s32 16, 16
          %596 = vsyncadd %s591, %s595
          %s597 = smul.addr %s30, 16
          %s598 = scalar_lea.hbm %s10, %s597
          %s600 = sshll.u32 %s593, 4
          %s601 = int_to_ptr.vmem [resolvable:$true] %s600
          %603 = dma.hbm_to_vmem [thread:$0]  %s598, 16, %s601, %s591
        $region60: #{tpu_custom_call.1} parent=23 // pred_fallthru
          _
        // Predicated region
        $region61: #{tpu_custom_call.1} parent=23 // pred_check
          %p604 = pneg %p335
        $region62: #{tpu_custom_call.1} parent=23 // pred_check_branch
          %606 = sbr.rel (%p604) target = $region64
        $region63: #{tpu_custom_call.1} parent=23 // pred_region
          %s607 = sand.u32 %s22, 1
          %s608 = scalar_lea.sflag [#allocation3], %s607
          %s609 = sand.u32 %s325, 1
          %s610 = smul.addr %s609, 64
          %s611 = scalar_lea.vmem [#allocation16], %s610
          %s613 = ssub.s32 1024, 1024
          %614 = vsyncadd %s608, %s613
          %s615 = smul.addr %s30, 16
          %s616 = smul.addr %s615, 64
          %s617 = scalar_lea.hbm %s11, %s616
          %s618 = sshll.u32 %s611, 4
          %s619 = int_to_ptr.vmem [resolvable:$true] %s618
          %624 = dma.hbm_to_vmem [thread:$0]  %s617, 1024, %s619, %s608, 64, 64, 4
        $region64: #{tpu_custom_call.1} parent=23 // pred_fallthru
          _
        // Predicated region
        $region65: #{tpu_custom_call.1} parent=23 // pred_check
          %p625 = pneg %p361
        $region66: #{tpu_custom_call.1} parent=23 // pred_check_branch
          %627 = sbr.rel (%p625) target = $region68
        $region67: #{tpu_custom_call.1} parent=23 // pred_region
          %s628 = sand.u32 %s22, 1
          %s629 = scalar_lea.sflag [#allocation3], %s628
          %s630 = sand.u32 %s351, 1
          %s631 = scalar_lea.vmem [#allocation17], %s630
          %s633 = ssub.s32 16, 16
          %634 = vsyncadd %s629, %s633
          %s635 = smul.addr %s30, 16
          %s636 = scalar_lea.hbm %s12, %s635
          %s638 = sshll.u32 %s631, 4
          %s639 = int_to_ptr.vmem [resolvable:$true] %s638
          %641 = dma.hbm_to_vmem [thread:$0]  %s636, 16, %s639, %s629
        $region68: #{tpu_custom_call.1} parent=23 // pred_fallthru
          _
      $region24: #{tpu_custom_call.1} parent=5 // pred_fallthru
        _
      %p642 = scmp.le.s32.totalorder 1, %s22
      %p643 = scmp.lt.s32.totalorder %s22, 3
      %p644 = pnand %p642, %p643
      %p645 = pneg %p644
      // Predicated region
      $region69: #{tpu_custom_call.1} parent=5 // pred_check
        _
      $region70: #{tpu_custom_call.1} parent=5 // pred_check_branch
        %647 = sbr.rel (%p644) target = $region72
      $region71: #{tpu_custom_call.1} parent=5 // pred_region
        %s648 = ssub.s32 %s22, 1
        // Predicated region
        $region73: #{tpu_custom_call.1} parent=71 // pred_check
          %p649 = pneg %p60
        $region74: #{tpu_custom_call.1} parent=71 // pred_check_branch
          %651 = sbr.rel (%p649) target = $region76
        $region75: #{tpu_custom_call.1} parent=71 // pred_region
          %652 = dma.done [#allocation3], 256
        $region76: #{tpu_custom_call.1} parent=71 // pred_fallthru
          _
        // Predicated region
        $region77: #{tpu_custom_call.1} parent=71 // pred_check
          %p653 = pneg %p81
        $region78: #{tpu_custom_call.1} parent=71 // pred_check_branch
          %655 = sbr.rel (%p653) target = $region80
        $region79: #{tpu_custom_call.1} parent=71 // pred_region
          %656 = dma.done [#allocation6], 128
        $region80: #{tpu_custom_call.1} parent=71 // pred_fallthru
          _
        %s657 = sand.u32 %s27, 1
        %s658 = scalar_lea.sflag [#allocation3], %s657
        %s659 = sand.u32 %s94, 1
        %s660 = scalar_lea.vmem [#allocation7], %s659
        // Predicated region
        $region81: #{tpu_custom_call.1} parent=71 // pred_check
          %p661 = pneg %p107
        $region82: #{tpu_custom_call.1} parent=71 // pred_check_branch
          %663 = sbr.rel (%p661) target = $region84
        $region83: #{tpu_custom_call.1} parent=71 // pred_region
          %664 = dma.done %s658, 16
        $region84: #{tpu_custom_call.1} parent=71 // pred_fallthru
          _
        %s665 = sand.u32 %s27, 1
        %s666 = scalar_lea.sflag [#allocation3], %s665
        %s667 = sand.u32 %s120, 1
        %s668 = scalar_lea.vmem [#allocation8], %s667
        // Predicated region
        $region85: #{tpu_custom_call.1} parent=71 // pred_check
          %p669 = pneg %p133
        $region86: #{tpu_custom_call.1} parent=71 // pred_check_branch
          %671 = sbr.rel (%p669) target = $region88
        $region87: #{tpu_custom_call.1} parent=71 // pred_region
          %672 = dma.done %s666, 16
        $region88: #{tpu_custom_call.1} parent=71 // pred_fallthru
          _
        %s673 = sand.u32 %s27, 1
        %s674 = scalar_lea.sflag [#allocation3], %s673
        %s675 = sand.u32 %s146, 1
        %s676 = smul.addr %s675, 16
        %s677 = scalar_lea.vmem [#allocation9], %s676
        // Predicated region
        $region89: #{tpu_custom_call.1} parent=71 // pred_check
          %p678 = pneg %p159
        $region90: #{tpu_custom_call.1} parent=71 // pred_check_branch
          %680 = sbr.rel (%p678) target = $region92
        $region91: #{tpu_custom_call.1} parent=71 // pred_region
          %681 = dma.done %s674, 256
        $region92: #{tpu_custom_call.1} parent=71 // pred_fallthru
          _
        %s682 = sand.u32 %s27, 1
        %s683 = scalar_lea.sflag [#allocation3], %s682
        %s684 = sand.u32 %s172, 1
        %s685 = smul.addr %s684, 16
        %s686 = scalar_lea.vmem [#allocation10], %s685
        // Predicated region
        $region93: #{tpu_custom_call.1} parent=71 // pred_check
          %p687 = pneg %p185
        $region94: #{tpu_custom_call.1} parent=71 // pred_check_branch
          %689 = sbr.rel (%p687) target = $region96
        $region95: #{tpu_custom_call.1} parent=71 // pred_region
          %690 = dma.done %s683, 256
        $region96: #{tpu_custom_call.1} parent=71 // pred_fallthru
          _
        %s691 = sand.u32 %s27, 1
        %s692 = scalar_lea.sflag [#allocation3], %s691
        %s693 = sand.u32 %s198, 1
        %s694 = scalar_lea.vmem [#allocation11], %s693
        // Predicated region
        $region97: #{tpu_custom_call.1} parent=71 // pred_check
          %p695 = pneg %p211
        $region98: #{tpu_custom_call.1} parent=71 // pred_check_branch
          %697 = sbr.rel (%p695) target = $region100
        $region99: #{tpu_custom_call.1} parent=71 // pred_region
          %698 = dma.done %s692, 16
        $region100: #{tpu_custom_call.1} parent=71 // pred_fallthru
          _
        %s699 = sand.u32 %s27, 1
        %s700 = scalar_lea.sflag [#allocation3], %s699
        %s701 = sand.u32 %s224, 1
        %s702 = scalar_lea.vmem [#allocation12], %s701
        // Predicated region
        $region101: #{tpu_custom_call.1} parent=71 // pred_check
          %p703 = pneg %p237
        $region102: #{tpu_custom_call.1} parent=71 // pred_check_branch
          %705 = sbr.rel (%p703) target = $region104
        $region103: #{tpu_custom_call.1} parent=71 // pred_region
          %706 = dma.done %s700, 16
        $region104: #{tpu_custom_call.1} parent=71 // pred_fallthru
          _
        %s707 = sand.u32 %s27, 1
        %s708 = scalar_lea.sflag [#allocation3], %s707
        %s709 = sand.u32 %s250, 1
        %s710 = scalar_lea.vmem [#allocation13], %s709
        // Predicated region
        $region105: #{tpu_custom_call.1} parent=71 // pred_check
          %p711 = pneg %p263
        $region106: #{tpu_custom_call.1} parent=71 // pred_check_branch
          %713 = sbr.rel (%p711) target = $region108
        $region107: #{tpu_custom_call.1} parent=71 // pred_region
          %714 = dma.done %s708, 16
        $region108: #{tpu_custom_call.1} parent=71 // pred_fallthru
          _
        %s715 = sand.u32 %s27, 1
        %s716 = scalar_lea.sflag [#allocation3], %s715
        %s717 = sand.u32 %s276, 1
        %s718 = smul.addr %s717, 16
        %s719 = scalar_lea.vmem [#allocation14], %s718
        // Predicated region
        $region109: #{tpu_custom_call.1} parent=71 // pred_check
          %p720 = pneg %p289
        $region110: #{tpu_custom_call.1} parent=71 // pred_check_branch
          %722 = sbr.rel (%p720) target = $region112
        $region111: #{tpu_custom_call.1} parent=71 // pred_region
          %723 = dma.done %s716, 256
        $region112: #{tpu_custom_call.1} parent=71 // pred_fallthru
          _
        %s724 = sand.u32 %s27, 1
        %s725 = scalar_lea.sflag [#allocation3], %s724
        %s726 = sand.u32 %s302, 1
        %s727 = scalar_lea.vmem [#allocation15], %s726
        // Predicated region
        $region113: #{tpu_custom_call.1} parent=71 // pred_check
          %p728 = pneg %p315
        $region114: #{tpu_custom_call.1} parent=71 // pred_check_branch
          %730 = sbr.rel (%p728) target = $region116
        $region115: #{tpu_custom_call.1} parent=71 // pred_region
          %731 = dma.done %s725, 16
        $region116: #{tpu_custom_call.1} parent=71 // pred_fallthru
          _
        %s732 = sand.u32 %s27, 1
        %s733 = scalar_lea.sflag [#allocation3], %s732
        %s734 = sand.u32 %s328, 1
        %s735 = smul.addr %s734, 64
        %s736 = scalar_lea.vmem [#allocation16], %s735
        // Predicated region
        $region117: #{tpu_custom_call.1} parent=71 // pred_check
          %p737 = pneg %p341
        $region118: #{tpu_custom_call.1} parent=71 // pred_check_branch
          %739 = sbr.rel (%p737) target = $region120
        $region119: #{tpu_custom_call.1} parent=71 // pred_region
          %740 = dma.done %s733, 1024
        $region120: #{tpu_custom_call.1} parent=71 // pred_fallthru
          _
        %s741 = sand.u32 %s27, 1
        %s742 = scalar_lea.sflag [#allocation3], %s741
        %s743 = sand.u32 %s354, 1
        %s744 = scalar_lea.vmem [#allocation17], %s743
        // Predicated region
        $region121: #{tpu_custom_call.1} parent=71 // pred_check
          %p745 = pneg %p367
        $region122: #{tpu_custom_call.1} parent=71 // pred_check_branch
          %747 = sbr.rel (%p745) target = $region124
        $region123: #{tpu_custom_call.1} parent=71 // pred_region
          %748 = dma.done %s742, 16
        $region124: #{tpu_custom_call.1} parent=71 // pred_fallthru
          _
        %p749 = pneg %p60
        %p750 = pneg %p57
        %p751 = pneg %p81
        %p752 = pneg %p78
        %s753 = sand.u32 %s27, 1
        %s754 = scalar_lea.sflag [#allocation3], %s753
        %s755 = sand.u32 %s94, 1
        %s756 = scalar_lea.vmem [#allocation7], %s755
        %p757 = pneg %p107
        %p758 = pneg %p104
        %s759 = sand.u32 %s27, 1
        %s760 = scalar_lea.sflag [#allocation3], %s759
        %s761 = sand.u32 %s120, 1
        %s762 = scalar_lea.vmem [#allocation8], %s761
        %p763 = pneg %p133
        %p764 = pneg %p130
        %s765 = sand.u32 %s27, 1
        %s766 = scalar_lea.sflag [#allocation3], %s765
        %s767 = sand.u32 %s146, 1
        %s768 = smul.addr %s767, 16
        %s769 = scalar_lea.vmem [#allocation9], %s768
        %p770 = pneg %p159
        %p771 = pneg %p156
        %s772 = sand.u32 %s27, 1
        %s773 = scalar_lea.sflag [#allocation3], %s772
        %s774 = sand.u32 %s172, 1
        %s775 = smul.addr %s774, 16
        %s776 = scalar_lea.vmem [#allocation10], %s775
        %p777 = pneg %p185
        %p778 = pneg %p182
        %s779 = sand.u32 %s27, 1
        %s780 = scalar_lea.sflag [#allocation3], %s779
        %s781 = sand.u32 %s198, 1
        %s782 = scalar_lea.vmem [#allocation11], %s781
        %p783 = pneg %p211
        %p784 = pneg %p208
        %s785 = sand.u32 %s27, 1
        %s786 = scalar_lea.sflag [#allocation3], %s785
        %s787 = sand.u32 %s224, 1
        %s788 = scalar_lea.vmem [#allocation12], %s787
        %p789 = pneg %p237
        %p790 = pneg %p234
        %s791 = sand.u32 %s27, 1
        %s792 = scalar_lea.sflag [#allocation3], %s791
        %s793 = sand.u32 %s250, 1
        %s794 = scalar_lea.vmem [#allocation13], %s793
        %p795 = pneg %p263
        %p796 = pneg %p260
        %s797 = sand.u32 %s27, 1
        %s798 = scalar_lea.sflag [#allocation3], %s797
        %s799 = sand.u32 %s276, 1
        %s800 = smul.addr %s799, 16
        %s801 = scalar_lea.vmem [#allocation14], %s800
        %p802 = pneg %p289
        %p803 = pneg %p286
        %s804 = sand.u32 %s27, 1
        %s805 = scalar_lea.sflag [#allocation3], %s804
        %s806 = sand.u32 %s302, 1
        %s807 = scalar_lea.vmem [#allocation15], %s806
        %p808 = pneg %p315
        %p809 = pneg %p312
        %s810 = sand.u32 %s27, 1
        %s811 = scalar_lea.sflag [#allocation3], %s810
        %s812 = sand.u32 %s328, 1
        %s813 = smul.addr %s812, 64
        %s814 = scalar_lea.vmem [#allocation16], %s813
        %p815 = pneg %p341
        %p816 = pneg %p338
        %s817 = sand.u32 %s27, 1
        %s818 = scalar_lea.sflag [#allocation3], %s817
        %s819 = sand.u32 %s354, 1
        %s820 = scalar_lea.vmem [#allocation17], %s819
        %p821 = pneg %p367
        %p822 = pneg %p364
        %p823 = pneg %p393
        %p824 = pneg %p390
        %s825 = smul.u32 2, %s31
        %s826 = smul.u32 2, %s31
        %p828 = scmp.eq.s32.totalorder %s32, 0
        // Predicated region
        $region125: #{tpu_custom_call.1} parent=71 // pred_check
          %p829 = pneg %p828
        $region126: #{tpu_custom_call.1} parent=71 // pred_check_branch
          %831 = sbr.rel (%p829) target = $region128
        $region127: #{tpu_custom_call.1} parent=71 // pred_region
          %v832 = vld [vmem:[#allocation2] sm:$0xff]
          %v833 = vld [vmem:[#allocation2 + $0x8] sm:$0xff]
          %vm834 = vcmask 261120
          %835 = vst.msk [vmem:[#allocation18] sm:$0xff] %vm834, %v832
          %836 = vst.msk [vmem:[#allocation18 + $0x8] sm:$0xff] %vm834, %v833
        $region128: #{tpu_custom_call.1} parent=71 // pred_fallthru
          _
        %v837 = vld [vmem:[#allocation18] sm:$0xff]
        %v838 = vld [vmem:[#allocation18 + $0x8] sm:$0xff]
        %v839 = vld [vmem:[%s660] sm:$0x1]
        %v840 = vld [vmem:[%s668] sm:$0x1]
        %vm841 = vcmask 261120
        %v842 = vsel %vm841, %v837, 0.0
        %843 = vadd.xlane.f32.xlu0 %v842
        %v844 = vpop.xlane.xlu0 %843
        %v845 = vsel %vm841, %v838, 0.0
        %846 = vadd.xlane.f32.xlu0 %v845
        %v847 = vpop.xlane.xlu0 %846
        %v848 = vrcp.pop 32.0
        %v849 = vmul.f32 %v844, %v848
        %v850 = vmul.f32 %v847, %v848
        %v851 = vsub.f32 %v837, %v849
        %v852 = vsub.f32 %v838, %v850
        %v853 = vmul.f32 %v851, %v851
        %v854 = vmul.f32 %v852, %v852
        %v855 = vsel %vm841, %v853, 0.0
        %856 = vadd.xlane.f32.xlu0 %v855
        %v857 = vpop.xlane.xlu0 %856
        %v858 = vsel %vm841, %v854, 0.0
        %859 = vadd.xlane.f32.xlu0 %v858
        %v860 = vpop.xlane.xlu0 %859
        %v861 = vmul.f32 %v857, %v848
        %v862 = vmul.f32 %v860, %v848
        %v863 = vadd.f32 %v861, 1e-05
        %v864 = vadd.f32 %v862, 1e-05
        %v865 = vrsqrt.pop %v863
        %v866 = vrsqrt.pop %v864
        %v867 = vmul.f32 %v851, %v865
        %v868 = vmul.f32 %v852, %v866
        %v870 = vlaneseq
        %v871 = vshrl.u32 %v870, 7
        %v872 = vsub.s32 0, %v871
        %v873 = vrot.slane %v839, %v872
        %v875 = vmul.f32 %v867, %v873
        %v876 = vmul.f32 %v868, %v873
        %v878 = vlaneseq
        %v879 = vshrl.u32 %v878, 7
        %v880 = vsub.s32 0, %v879
        %v881 = vrot.slane %v840, %v880
        %v883 = vadd.f32 %v875, %v881
        %v884 = vadd.f32 %v876, %v881
        %v885 = vpack.c.bf16 %v884, %v883
        %v886 = vld [vmem:[%s677] sm:$0xf]
        %v887 = vld [vmem:[%s677 + $0x4] sm:$0xf]
        %v888 = vld [vmem:[%s677 + $0x8] sm:$0xf]
        %v889 = vld [vmem:[%s677 + $0xc] sm:$0xf]
        %v894 = vunpack.c.l.b16 %v886
        %v895 = vunpack.c.l.b16 %v887
        %v896 = vunpack.c.l.b16 %v888
        %v897 = vunpack.c.l.b16 %v889
        %v898 = vpack.c.b16 %v895, %v894
        %v899 = vpack.c.b16 %v897, %v896
        %v903 = vsel %vm841, %v885, 0
        %905 = vmatprep.subr.bf16.mxu0 0
        %906 = vmatpush1.bf16.msra.mxu0 %v898
        %907 = vmatprep.subr.bf16.mxu0 0
        %908 = vmatpush1.bf16.msra.mxu0 %v899
        %909 = vmatprep.subr.bf16.mxu0 0
        %910 = vmatpush1.bf16.msra.mxu0 0
        %911 = vmatprep.subr.bf16.mxu0 0
        %912 = vmatpush1.bf16.msra.mxu0 0
        %913 = vmatprep.subr.bf16.mxu0 0
        %914 = vmatpush1.bf16.msra.mxu0 0
        %915 = vmatprep.subr.bf16.mxu0 0
        %916 = vmatpush1.bf16.msra.mxu0 0
        %917 = vmatprep.subr.bf16.mxu0 0
        %918 = vmatpush1.bf16.msra.mxu0 0
        %919 = vmatprep.subr.bf16.mxu0 0
        %920 = vmatpush1.bf16.msra.mxu0 0
        %921 = vmatprep.subr.bf16.mxu0 0
        %922 = vmatpush1.bf16.msra.mxu0 0
        %923 = vmatprep.subr.bf16.mxu0 0
        %924 = vmatpush1.bf16.msra.mxu0 0
        %925 = vmatprep.subr.bf16.mxu0 0
        %926 = vmatpush1.bf16.msra.mxu0 0
        %927 = vmatprep.subr.bf16.mxu0 0
        %928 = vmatpush1.bf16.msra.mxu0 0
        %929 = vmatprep.subr.bf16.mxu0 0
        %930 = vmatpush1.bf16.msra.mxu0 0
        %931 = vmatprep.subr.bf16.mxu0 0
        %932 = vmatpush1.bf16.msra.mxu0 0
        %933 = vmatprep.subr.bf16.mxu0 0
        %934 = vmatpush1.bf16.msra.mxu0 0
        %935 = vmatprep.subr.bf16.mxu0 0
        %936 = vmatpush1.bf16.msra.mxu0 0
        %937 = vmatprep.mubr.bf16.mxu0 0
        %938 = vmatmul.mubr.bf16.gmra.mrb[0].mxu0 %v903
        %v939 = vpop.f32.mrb[0].mxu0
        %v940 = vadd.f32 0.0, %v939
        %v941 = vpop.f32.mrb[0].mxu0
        %v942 = vpop.f32.mrb[0].mxu0
        %v943 = vadd.f32 0.0, %v942
        %v944 = vpop.f32.mrb[0].mxu0
        %945 = vdwg.mxu0
        %v946 = vld [vmem:[#allocation5] sm:$0xff]
        %v947 = vmul.f32 %v940, 0.35355338
        %v948 = vmul.f32 %v943, 0.35355338
        %v949 = vpack.c.bf16 %v947, %v947
        %v950 = vpack.c.bf16 %v948, %v948
        %v951 = vpack.c.bf16 %v940, %v940
        %v952 = vpack.c.bf16 %v943, %v943
        %954 = vrot.lane.b32.xlu0 %v951, 96
        %v955 = vpop.permute.xlu0 %954
        %vm956 = vcmask 64512
        %v958 = vsel %vm956, %v949, 0
        %v961 = vsel %vm956, %v955, 0
        %963 = vmatprep.subr.bf16.mxu0 0
        %964 = vmatpush1.bf16.xpose.msra.mxu0 %v961
        %965 = vmatprep.subr.bf16.mxu0 0
        %966 = vmatpush1.bf16.xpose.msra.mxu0 0
        %967 = vmatprep.subr.bf16.mxu0 0
        %968 = vmatpush1.bf16.xpose.msra.mxu0 0
        %969 = vmatprep.subr.bf16.mxu0 0
        %970 = vmatpush1.bf16.xpose.msra.mxu0 0
        %971 = vmatprep.subr.bf16.mxu0 0
        %972 = vmatpush1.bf16.xpose.msra.mxu0 0
        %973 = vmatprep.subr.bf16.mxu0 0
        %974 = vmatpush1.bf16.xpose.msra.mxu0 0
        %975 = vmatprep.subr.bf16.mxu0 0
        %976 = vmatpush1.bf16.xpose.msra.mxu0 0
        %977 = vmatprep.subr.bf16.mxu0 0
        %978 = vmatpush1.bf16.xpose.msra.mxu0 0
        %979 = vmatprep.subr.bf16.mxu0 0
        %980 = vmatpush1.bf16.xpose.msra.mxu0 0
        %981 = vmatprep.subr.bf16.mxu0 0
        %982 = vmatpush1.bf16.xpose.msra.mxu0 0
        %983 = vmatprep.subr.bf16.mxu0 0
        %984 = vmatpush1.bf16.xpose.msra.mxu0 0
        %985 = vmatprep.subr.bf16.mxu0 0
        %986 = vmatpush1.bf16.xpose.msra.mxu0 0
        %987 = vmatprep.subr.bf16.mxu0 0
        %988 = vmatpush1.bf16.xpose.msra.mxu0 0
        %989 = vmatprep.subr.bf16.mxu0 0
        %990 = vmatpush1.bf16.xpose.msra.mxu0 0
        %991 = vmatprep.subr.bf16.mxu0 0
        %992 = vmatpush1.bf16.xpose.msra.mxu0 0
        %993 = vmatprep.subr.bf16.mxu0 0
        %994 = vmatpush1.bf16.xpose.msra.mxu0 0
        %995 = vmatprep.mubr.bf16.mxu0 0
        %996 = vmatmul.mubr.bf16.gmra.mrb[0].mxu0 %v958
        %v997 = vpop.f32.mrb[0].mxu0
        %v998 = vadd.f32 %v946, %v997
        %v999 = vpop.f32.mrb[0].mxu0
        %v1000 = vpop.f32.mrb[0].mxu0
        %v1001 = vpop.f32.mrb[0].mxu0
        %1002 = vdwg.mxu0
        %1004 = vrot.lane.b32.xlu0 %v952, 96
        %v1005 = vpop.permute.xlu0 %1004
        %v1007 = vsel %vm956, %v950, 0
        %v1010 = vsel %vm956, %v1005, 0
        %1012 = vmatprep.subr.bf16.mxu0 0
        %1013 = vmatpush1.bf16.xpose.msra.mxu0 %v1010
        %1014 = vmatprep.subr.bf16.mxu0 0
        %1015 = vmatpush1.bf16.xpose.msra.mxu0 0
        %1016 = vmatprep.subr.bf16.mxu0 0
        %1017 = vmatpush1.bf16.xpose.msra.mxu0 0
        %1018 = vmatprep.subr.bf16.mxu0 0
        %1019 = vmatpush1.bf16.xpose.msra.mxu0 0
        %1020 = vmatprep.subr.bf16.mxu0 0
        %1021 = vmatpush1.bf16.xpose.msra.mxu0 0
        %1022 = vmatprep.subr.bf16.mxu0 0
        %1023 = vmatpush1.bf16.xpose.msra.mxu0 0
        %1024 = vmatprep.subr.bf16.mxu0 0
        %1025 = vmatpush1.bf16.xpose.msra.mxu0 0
        %1026 = vmatprep.subr.bf16.mxu0 0
        %1027 = vmatpush1.bf16.xpose.msra.mxu0 0
        %1028 = vmatprep.subr.bf16.mxu0 0
        %1029 = vmatpush1.bf16.xpose.msra.mxu0 0
        %1030 = vmatprep.subr.bf16.mxu0 0
        %1031 = vmatpush1.bf16.xpose.msra.mxu0 0
        %1032 = vmatprep.subr.bf16.mxu0 0
        %1033 = vmatpush1.bf16.xpose.msra.mxu0 0
        %1034 = vmatprep.subr.bf16.mxu0 0
        %1035 = vmatpush1.bf16.xpose.msra.mxu0 0
        %1036 = vmatprep.subr.bf16.mxu0 0
        %1037 = vmatpush1.bf16.xpose.msra.mxu0 0
        %1038 = vmatprep.subr.bf16.mxu0 0
        %1039 = vmatpush1.bf16.xpose.msra.mxu0 0
        %1040 = vmatprep.subr.bf16.mxu0 0
        %1041 = vmatpush1.bf16.xpose.msra.mxu0 0
        %1042 = vmatprep.subr.bf16.mxu0 0
        %1043 = vmatpush1.bf16.xpose.msra.mxu0 0
        %1044 = vmatprep.mubr.bf16.mxu0 0
        %1045 = vmatmul.mubr.bf16.gmra.mrb[0].mxu0 %v1007
        %v1046 = vpop.f32.mrb[0].mxu0
        %v1047 = vadd.f32 %v946, %v1046
        %v1048 = vpop.f32.mrb[0].mxu0
        %v1049 = vpop.f32.mrb[0].mxu0
        %v1050 = vpop.f32.mrb[0].mxu0
        %1051 = vdwg.mxu0
        %v1052 = vsel %vm956, %v998, -inf
        %1053 = vmax.xlane.f32.xlu0 %v1052
        %v1054 = vpop.xlane.xlu0 %1053
        %v1055 = vsel %vm956, %v1047, -inf
        %1056 = vmax.xlane.f32.xlu0 %v1055
        %v1057 = vpop.xlane.xlu0 %1056
        %v1058 = vsub.f32 %v998, %v1054
        %v1059 = vsub.f32 %v1047, %v1057
        %v1060 = vmul.f32 %v1058, 1.442695
        %v1061 = vpow.pop %v1060
        %v1062 = vmul.f32 %v1059, 1.442695
        %v1063 = vpow.pop %v1062
        %v1064 = vsel %vm956, %v1061, 0.0
        %1065 = vadd.xlane.f32.xlu0 %v1064
        %v1066 = vpop.xlane.xlu0 %1065
        %v1067 = vsel %vm956, %v1063, 0.0
        %1068 = vadd.xlane.f32.xlu0 %v1067
        %v1069 = vpop.xlane.xlu0 %1068
        %v1070 = vpack.c.bf16 %v1061, %v1061
        %v1071 = vpack.c.bf16 %v1063, %v1063
        %1072 = vrot.lane.b32.xlu0 %v951, 64
        %v1073 = vpop.permute.xlu0 %1072
        %v1075 = vsel %vm956, %v1070, 0
        %vm1077 = vcmask 1043456
        %v1079 = vsel %vm1077, %v1073, 0
        %1081 = vmatprep.subr.bf16.mxu0 0
        %1082 = vmatpush1.bf16.msra.mxu0 %v1079
        %1083 = vmatprep.subr.bf16.mxu0 0
        %1084 = vmatpush1.bf16.msra.mxu0 0
        %1085 = vmatprep.subr.bf16.mxu0 0
        %1086 = vmatpush1.bf16.msra.mxu0 0
        %1087 = vmatprep.subr.bf16.mxu0 0
        %1088 = vmatpush1.bf16.msra.mxu0 0
        %1089 = vmatprep.subr.bf16.mxu0 0
        %1090 = vmatpush1.bf16.msra.mxu0 0
        %1091 = vmatprep.subr.bf16.mxu0 0
        %1092 = vmatpush1.bf16.msra.mxu0 0
        %1093 = vmatprep.subr.bf16.mxu0 0
        %1094 = vmatpush1.bf16.msra.mxu0 0
        %1095 = vmatprep.subr.bf16.mxu0 0
        %1096 = vmatpush1.bf16.msra.mxu0 0
        %1097 = vmatprep.subr.bf16.mxu0 0
        %1098 = vmatpush1.bf16.msra.mxu0 0
        %1099 = vmatprep.subr.bf16.mxu0 0
        %1100 = vmatpush1.bf16.msra.mxu0 0
        %1101 = vmatprep.subr.bf16.mxu0 0
        %1102 = vmatpush1.bf16.msra.mxu0 0
        %1103 = vmatprep.subr.bf16.mxu0 0
        %1104 = vmatpush1.bf16.msra.mxu0 0
        %1105 = vmatprep.subr.bf16.mxu0 0
        %1106 = vmatpush1.bf16.msra.mxu0 0
        %1107 = vmatprep.subr.bf16.mxu0 0
        %1108 = vmatpush1.bf16.msra.mxu0 0
        %1109 = vmatprep.subr.bf16.mxu0 0
        %1110 = vmatpush1.bf16.msra.mxu0 0
        %1111 = vmatprep.subr.bf16.mxu0 0
        %1112 = vmatpush1.bf16.msra.mxu0 0
        %1113 = vmatprep.mubr.bf16.mxu0 0
        %1114 = vmatmul.mubr.bf16.gmra.mrb[0].mxu0 %v1075
        %v1115 = vpop.f32.mrb[0].mxu0
        %v1116 = vadd.f32 0.0, %v1115
        %v1117 = vpop.f32.mrb[0].mxu0
        %v1118 = vpop.f32.mrb[0].mxu0
        %v1119 = vpop.f32.mrb[0].mxu0
        %1120 = vdwg.mxu0
        %1121 = vrot.lane.b32.xlu0 %v952, 64
        %v1122 = vpop.permute.xlu0 %1121
        %v1124 = vsel %vm956, %v1071, 0
        %v1127 = vsel %vm1077, %v1122, 0
        %1129 = vmatprep.subr.bf16.mxu0 0
        %1130 = vmatpush1.bf16.msra.mxu0 %v1127
        %1131 = vmatprep.subr.bf16.mxu0 0
        %1132 = vmatpush1.bf16.msra.mxu0 0
        %1133 = vmatprep.subr.bf16.mxu0 0
        %1134 = vmatpush1.bf16.msra.mxu0 0
        %1135 = vmatprep.subr.bf16.mxu0 0
        %1136 = vmatpush1.bf16.msra.mxu0 0
        %1137 = vmatprep.subr.bf16.mxu0 0
        %1138 = vmatpush1.bf16.msra.mxu0 0
        %1139 = vmatprep.subr.bf16.mxu0 0
        %1140 = vmatpush1.bf16.msra.mxu0 0
        %1141 = vmatprep.subr.bf16.mxu0 0
        %1142 = vmatpush1.bf16.msra.mxu0 0
        %1143 = vmatprep.subr.bf16.mxu0 0
        %1144 = vmatpush1.bf16.msra.mxu0 0
        %1145 = vmatprep.subr.bf16.mxu0 0
        %1146 = vmatpush1.bf16.msra.mxu0 0
        %1147 = vmatprep.subr.bf16.mxu0 0
        %1148 = vmatpush1.bf16.msra.mxu0 0
        %1149 = vmatprep.subr.bf16.mxu0 0
        %1150 = vmatpush1.bf16.msra.mxu0 0
        %1151 = vmatprep.subr.bf16.mxu0 0
        %1152 = vmatpush1.bf16.msra.mxu0 0
        %1153 = vmatprep.subr.bf16.mxu0 0
        %1154 = vmatpush1.bf16.msra.mxu0 0
        %1155 = vmatprep.subr.bf16.mxu0 0
        %1156 = vmatpush1.bf16.msra.mxu0 0
        %1157 = vmatprep.subr.bf16.mxu0 0
        %1158 = vmatpush1.bf16.msra.mxu0 0
        %1159 = vmatprep.subr.bf16.mxu0 0
        %1160 = vmatpush1.bf16.msra.mxu0 0
        %1161 = vmatprep.mubr.bf16.mxu0 0
        %1162 = vmatmul.mubr.bf16.gmra.mrb[0].mxu0 %v1124
        %v1163 = vpop.f32.mrb[0].mxu0
        %v1164 = vadd.f32 0.0, %v1163
        %v1165 = vpop.f32.mrb[0].mxu0
        %v1166 = vpop.f32.mrb[0].mxu0
        %v1167 = vpop.f32.mrb[0].mxu0
        %1168 = vdwg.mxu0
        %v1169 = vrcp.pop %v1066
        %v1170 = vrcp.pop %v1069
        %v1171 = vmul.f32 %v1116, %v1169
        %v1172 = vmul.f32 %v1164, %v1170
        %1174 = vrot.lane.b32.xlu0 %v949, 120
        %v1175 = vpop.permute.xlu0 %1174
        %1176 = vrot.lane.b32.xlu0 %v951, 88
        %v1177 = vpop.permute.xlu0 %1176
        %v1179 = vsel %vm956, %v1175, 0
        %v1182 = vsel %vm956, %v1177, 0
        %1184 = vmatprep.subr.bf16.mxu0 0
        %1185 = vmatpush1.bf16.xpose.msra.mxu0 %v1182
        %1186 = vmatprep.subr.bf16.mxu0 0
        %1187 = vmatpush1.bf16.xpose.msra.mxu0 0
        %1188 = vmatprep.subr.bf16.mxu0 0
        %1189 = vmatpush1.bf16.xpose.msra.mxu0 0
        %1190 = vmatprep.subr.bf16.mxu0 0
        %1191 = vmatpush1.bf16.xpose.msra.mxu0 0
        %1192 = vmatprep.subr.bf16.mxu0 0
        %1193 = vmatpush1.bf16.xpose.msra.mxu0 0
        %1194 = vmatprep.subr.bf16.mxu0 0
        %1195 = vmatpush1.bf16.xpose.msra.mxu0 0
        %1196 = vmatprep.subr.bf16.mxu0 0
        %1197 = vmatpush1.bf16.xpose.msra.mxu0 0
        %1198 = vmatprep.subr.bf16.mxu0 0
        %1199 = vmatpush1.bf16.xpose.msra.mxu0 0
        %1200 = vmatprep.subr.bf16.mxu0 0
        %1201 = vmatpush1.bf16.xpose.msra.mxu0 0
        %1202 = vmatprep.subr.bf16.mxu0 0
        %1203 = vmatpush1.bf16.xpose.msra.mxu0 0
        %1204 = vmatprep.subr.bf16.mxu0 0
        %1205 = vmatpush1.bf16.xpose.msra.mxu0 0
        %1206 = vmatprep.subr.bf16.mxu0 0
        %1207 = vmatpush1.bf16.xpose.msra.mxu0 0
        %1208 = vmatprep.subr.bf16.mxu0 0
        %1209 = vmatpush1.bf16.xpose.msra.mxu0 0
        %1210 = vmatprep.subr.bf16.mxu0 0
        %1211 = vmatpush1.bf16.xpose.msra.mxu0 0
        %1212 = vmatprep.subr.bf16.mxu0 0
        %1213 = vmatpush1.bf16.xpose.msra.mxu0 0
        %1214 = vmatprep.subr.bf16.mxu0 0
        %1215 = vmatpush1.bf16.xpose.msra.mxu0 0
        %1216 = vmatprep.mubr.bf16.mxu0 0
        %1217 = vmatmul.mubr.bf16.gmra.mrb[0].mxu0 %v1179
        %v1218 = vpop.f32.mrb[0].mxu0
        %v1219 = vadd.f32 %v946, %v1218
        %v1220 = vpop.f32.mrb[0].mxu0
        %v1221 = vpop.f32.mrb[0].mxu0
        %v1222 = vpop.f32.mrb[0].mxu0
        %1223 = vdwg.mxu0
        %1225 = vrot.lane.b32.xlu0 %v950, 120
        %v1226 = vpop.permute.xlu0 %1225
        %1227 = vrot.lane.b32.xlu0 %v952, 88
        %v1228 = vpop.permute.xlu0 %1227
        %v1230 = vsel %vm956, %v1226, 0
        %v1233 = vsel %vm956, %v1228, 0
        %1235 = vmatprep.subr.bf16.mxu0 0
        %1236 = vmatpush1.bf16.xpose.msra.mxu0 %v1233
        %1237 = vmatprep.subr.bf16.mxu0 0
        %1238 = vmatpush1.bf16.xpose.msra.mxu0 0
        %1239 = vmatprep.subr.bf16.mxu0 0
        %1240 = vmatpush1.bf16.xpose.msra.mxu0 0
        %1241 = vmatprep.subr.bf16.mxu0 0
        %1242 = vmatpush1.bf16.xpose.msra.mxu0 0
        %1243 = vmatprep.subr.bf16.mxu0 0
        %1244 = vmatpush1.bf16.xpose.msra.mxu0 0
        %1245 = vmatprep.subr.bf16.mxu0 0
        %1246 = vmatpush1.bf16.xpose.msra.mxu0 0
        %1247 = vmatprep.subr.bf16.mxu0 0
        %1248 = vmatpush1.bf16.xpose.msra.mxu0 0
        %1249 = vmatprep.subr.bf16.mxu0 0
        %1250 = vmatpush1.bf16.xpose.msra.mxu0 0
        %1251 = vmatprep.subr.bf16.mxu0 0
        %1252 = vmatpush1.bf16.xpose.msra.mxu0 0
        %1253 = vmatprep.subr.bf16.mxu0 0
        %1254 = vmatpush1.bf16.xpose.msra.mxu0 0
        %1255 = vmatprep.subr.bf16.mxu0 0
        %1256 = vmatpush1.bf16.xpose.msra.mxu0 0
        %1257 = vmatprep.subr.bf16.mxu0 0
        %1258 = vmatpush1.bf16.xpose.msra.mxu0 0
        %1259 = vmatprep.subr.bf16.mxu0 0
        %1260 = vmatpush1.bf16.xpose.msra.mxu0 0
        %1261 = vmatprep.subr.bf16.mxu0 0
        %1262 = vmatpush1.bf16.xpose.msra.mxu0 0
        %1263 = vmatprep.subr.bf16.mxu0 0
        %1264 = vmatpush1.bf16.xpose.msra.mxu0 0
        %1265 = vmatprep.subr.bf16.mxu0 0
        %1266 = vmatpush1.bf16.xpose.msra.mxu0 0
        %1267 = vmatprep.mubr.bf16.mxu0 0
        %1268 = vmatmul.mubr.bf16.gmra.mrb[0].mxu0 %v1230
        %v1269 = vpop.f32.mrb[0].mxu0
        %v1270 = vadd.f32 %v946, %v1269
        %v1271 = vpop.f32.mrb[0].mxu0
        %v1272 = vpop.f32.mrb[0].mxu0
        %v1273 = vpop.f32.mrb[0].mxu0
        %1274 = vdwg.mxu0
        %v1275 = vsel %vm956, %v1219, -inf
        %1276 = vmax.xlane.f32.xlu0 %v1275
        %v1277 = vpop.xlane.xlu0 %1276
        %v1278 = vsel %vm956, %v1270, -inf
        %1279 = vmax.xlane.f32.xlu0 %v1278
        %v1280 = vpop.xlane.xlu0 %1279
        %v1281 = vsub.f32 %v1219, %v1277
        %v1282 = vsub.f32 %v1270, %v1280
        %v1283 = vmul.f32 %v1281, 1.442695
        %v1284 = vpow.pop %v1283
        %v1285 = vmul.f32 %v1282, 1.442695
        %v1286 = vpow.pop %v1285
        %v1287 = vsel %vm956, %v1284, 0.0
        %1288 = vadd.xlane.f32.xlu0 %v1287
        %v1289 = vpop.xlane.xlu0 %1288
        %v1290 = vsel %vm956, %v1286, 0.0
        %1291 = vadd.xlane.f32.xlu0 %v1290
        %v1292 = vpop.xlane.xlu0 %1291
        %v1293 = vpack.c.bf16 %v1284, %v1284
        %v1294 = vpack.c.bf16 %v1286, %v1286
        %1295 = vrot.lane.b32.xlu0 %v951, 56
        %v1296 = vpop.permute.xlu0 %1295
        %v1298 = vsel %vm956, %v1293, 0
        %v1301 = vsel %vm1077, %v1296, 0
        %1303 = vmatprep.subr.bf16.mxu0 0
        %1304 = vmatpush1.bf16.msra.mxu0 %v1301
        %1305 = vmatprep.subr.bf16.mxu0 0
        %1306 = vmatpush1.bf16.msra.mxu0 0
        %1307 = vmatprep.subr.bf16.mxu0 0
        %1308 = vmatpush1.bf16.msra.mxu0 0
        %1309 = vmatprep.subr.bf16.mxu0 0
        %1310 = vmatpush1.bf16.msra.mxu0 0
        %1311 = vmatprep.subr.bf16.mxu0 0
        %1312 = vmatpush1.bf16.msra.mxu0 0
        %1313 = vmatprep.subr.bf16.mxu0 0
        %1314 = vmatpush1.bf16.msra.mxu0 0
        %1315 = vmatprep.subr.bf16.mxu0 0
        %1316 = vmatpush1.bf16.msra.mxu0 0
        %1317 = vmatprep.subr.bf16.mxu0 0
        %1318 = vmatpush1.bf16.msra.mxu0 0
        %1319 = vmatprep.subr.bf16.mxu0 0
        %1320 = vmatpush1.bf16.msra.mxu0 0
        %1321 = vmatprep.subr.bf16.mxu0 0
        %1322 = vmatpush1.bf16.msra.mxu0 0
        %1323 = vmatprep.subr.bf16.mxu0 0
        %1324 = vmatpush1.bf16.msra.mxu0 0
        %1325 = vmatprep.subr.bf16.mxu0 0
        %1326 = vmatpush1.bf16.msra.mxu0 0
        %1327 = vmatprep.subr.bf16.mxu0 0
        %1328 = vmatpush1.bf16.msra.mxu0 0
        %1329 = vmatprep.subr.bf16.mxu0 0
        %1330 = vmatpush1.bf16.msra.mxu0 0
        %1331 = vmatprep.subr.bf16.mxu0 0
        %1332 = vmatpush1.bf16.msra.mxu0 0
        %1333 = vmatprep.subr.bf16.mxu0 0
        %1334 = vmatpush1.bf16.msra.mxu0 0
        %1335 = vmatprep.mubr.bf16.mxu0 0
        %1336 = vmatmul.mubr.bf16.gmra.mrb[0].mxu0 %v1298
        %v1337 = vpop.f32.mrb[0].mxu0
        %v1338 = vadd.f32 0.0, %v1337
        %v1339 = vpop.f32.mrb[0].mxu0
        %v1340 = vpop.f32.mrb[0].mxu0
        %v1341 = vpop.f32.mrb[0].mxu0
        %1342 = vdwg.mxu0
        %1343 = vrot.lane.b32.xlu0 %v952, 56
        %v1344 = vpop.permute.xlu0 %1343
        %v1346 = vsel %vm956, %v1294, 0
        %v1349 = vsel %vm1077, %v1344, 0
        %1351 = vmatprep.subr.bf16.mxu0 0
        %1352 = vmatpush1.bf16.msra.mxu0 %v1349
        %1353 = vmatprep.subr.bf16.mxu0 0
        %1354 = vmatpush1.bf16.msra.mxu0 0
        %1355 = vmatprep.subr.bf16.mxu0 0
        %1356 = vmatpush1.bf16.msra.mxu0 0
        %1357 = vmatprep.subr.bf16.mxu0 0
        %1358 = vmatpush1.bf16.msra.mxu0 0
        %1359 = vmatprep.subr.bf16.mxu0 0
        %1360 = vmatpush1.bf16.msra.mxu0 0
        %1361 = vmatprep.subr.bf16.mxu0 0
        %1362 = vmatpush1.bf16.msra.mxu0 0
        %1363 = vmatprep.subr.bf16.mxu0 0
        %1364 = vmatpush1.bf16.msra.mxu0 0
        %1365 = vmatprep.subr.bf16.mxu0 0
        %1366 = vmatpush1.bf16.msra.mxu0 0
        %1367 = vmatprep.subr.bf16.mxu0 0
        %1368 = vmatpush1.bf16.msra.mxu0 0
        %1369 = vmatprep.subr.bf16.mxu0 0
        %1370 = vmatpush1.bf16.msra.mxu0 0
        %1371 = vmatprep.subr.bf16.mxu0 0
        %1372 = vmatpush1.bf16.msra.mxu0 0
        %1373 = vmatprep.subr.bf16.mxu0 0
        %1374 = vmatpush1.bf16.msra.mxu0 0
        %1375 = vmatprep.subr.bf16.mxu0 0
        %1376 = vmatpush1.bf16.msra.mxu0 0
        %1377 = vmatprep.subr.bf16.mxu0 0
        %1378 = vmatpush1.bf16.msra.mxu0 0
        %1379 = vmatprep.subr.bf16.mxu0 0
        %1380 = vmatpush1.bf16.msra.mxu0 0
        %1381 = vmatprep.subr.bf16.mxu0 0
        %1382 = vmatpush1.bf16.msra.mxu0 0
        %1383 = vmatprep.mubr.bf16.mxu0 0
        %1384 = vmatmul.mubr.bf16.gmra.mrb[0].mxu0 %v1346
        %v1385 = vpop.f32.mrb[0].mxu0
        %v1386 = vadd.f32 0.0, %v1385
        %v1387 = vpop.f32.mrb[0].mxu0
        %v1388 = vpop.f32.mrb[0].mxu0
        %v1389 = vpop.f32.mrb[0].mxu0
        %1390 = vdwg.mxu0
        %v1391 = vrcp.pop %v1289
        %v1392 = vrcp.pop %v1292
        %v1393 = vmul.f32 %v1338, %v1391
        %v1394 = vmul.f32 %v1386, %v1392
        %1395 = vrot.lane.b32.xlu0 %v949, 112
        %v1396 = vpop.permute.xlu0 %1395
        %1397 = vrot.lane.b32.xlu0 %v951, 80
        %v1398 = vpop.permute.xlu0 %1397
        %v1400 = vsel %vm956, %v1396, 0
        %v1403 = vsel %vm956, %v1398, 0
        %1405 = vmatprep.subr.bf16.mxu0 0
        %1406 = vmatpush1.bf16.xpose.msra.mxu0 %v1403
        %1407 = vmatprep.subr.bf16.mxu0 0
        %1408 = vmatpush1.bf16.xpose.msra.mxu0 0
        %1409 = vmatprep.subr.bf16.mxu0 0
        %1410 = vmatpush1.bf16.xpose.msra.mxu0 0
        %1411 = vmatprep.subr.bf16.mxu0 0
        %1412 = vmatpush1.bf16.xpose.msra.mxu0 0
        %1413 = vmatprep.subr.bf16.mxu0 0
        %1414 = vmatpush1.bf16.xpose.msra.mxu0 0
        %1415 = vmatprep.subr.bf16.mxu0 0
        %1416 = vmatpush1.bf16.xpose.msra.mxu0 0
        %1417 = vmatprep.subr.bf16.mxu0 0
        %1418 = vmatpush1.bf16.xpose.msra.mxu0 0
        %1419 = vmatprep.subr.bf16.mxu0 0
        %1420 = vmatpush1.bf16.xpose.msra.mxu0 0
        %1421 = vmatprep.subr.bf16.mxu0 0
        %1422 = vmatpush1.bf16.xpose.msra.mxu0 0
        %1423 = vmatprep.subr.bf16.mxu0 0
        %1424 = vmatpush1.bf16.xpose.msra.mxu0 0
        %1425 = vmatprep.subr.bf16.mxu0 0
        %1426 = vmatpush1.bf16.xpose.msra.mxu0 0
        %1427 = vmatprep.subr.bf16.mxu0 0
        %1428 = vmatpush1.bf16.xpose.msra.mxu0 0
        %1429 = vmatprep.subr.bf16.mxu0 0
        %1430 = vmatpush1.bf16.xpose.msra.mxu0 0
        %1431 = vmatprep.subr.bf16.mxu0 0
        %1432 = vmatpush1.bf16.xpose.msra.mxu0 0
        %1433 = vmatprep.subr.bf16.mxu0 0
        %1434 = vmatpush1.bf16.xpose.msra.mxu0 0
        %1435 = vmatprep.subr.bf16.mxu0 0
        %1436 = vmatpush1.bf16.xpose.msra.mxu0 0
        %1437 = vmatprep.mubr.bf16.mxu0 0
        %1438 = vmatmul.mubr.bf16.gmra.mrb[0].mxu0 %v1400
        %v1439 = vpop.f32.mrb[0].mxu0
        %v1440 = vadd.f32 %v946, %v1439
        %v1441 = vpop.f32.mrb[0].mxu0
        %v1442 = vpop.f32.mrb[0].mxu0
        %v1443 = vpop.f32.mrb[0].mxu0
        %1444 = vdwg.mxu0
        %1445 = vrot.lane.b32.xlu0 %v950, 112
        %v1446 = vpop.permute.xlu0 %1445
        %1447 = vrot.lane.b32.xlu0 %v952, 80
        %v1448 = vpop.permute.xlu0 %1447
        %v1450 = vsel %vm956, %v1446, 0
        %v1453 = vsel %vm956, %v1448, 0
        %1455 = vmatprep.subr.bf16.mxu0 0
        %1456 = vmatpush1.bf16.xpose.msra.mxu0 %v1453
        %1457 = vmatprep.subr.bf16.mxu0 0
        %1458 = vmatpush1.bf16.xpose.msra.mxu0 0
        %1459 = vmatprep.subr.bf16.mxu0 0
        %1460 = vmatpush1.bf16.xpose.msra.mxu0 0
        %1461 = vmatprep.subr.bf16.mxu0 0
        %1462 = vmatpush1.bf16.xpose.msra.mxu0 0
        %1463 = vmatprep.subr.bf16.mxu0 0
        %1464 = vmatpush1.bf16.xpose.msra.mxu0 0
        %1465 = vmatprep.subr.bf16.mxu0 0
        %1466 = vmatpush1.bf16.xpose.msra.mxu0 0
        %1467 = vmatprep.subr.bf16.mxu0 0
        %1468 = vmatpush1.bf16.xpose.msra.mxu0 0
        %1469 = vmatprep.subr.bf16.mxu0 0
        %1470 = vmatpush1.bf16.xpose.msra.mxu0 0
        %1471 = vmatprep.subr.bf16.mxu0 0
        %1472 = vmatpush1.bf16.xpose.msra.mxu0 0
        %1473 = vmatprep.subr.bf16.mxu0 0
        %1474 = vmatpush1.bf16.xpose.msra.mxu0 0
        %1475 = vmatprep.subr.bf16.mxu0 0
        %1476 = vmatpush1.bf16.xpose.msra.mxu0 0
        %1477 = vmatprep.subr.bf16.mxu0 0
        %1478 = vmatpush1.bf16.xpose.msra.mxu0 0
        %1479 = vmatprep.subr.bf16.mxu0 0
        %1480 = vmatpush1.bf16.xpose.msra.mxu0 0
        %1481 = vmatprep.subr.bf16.mxu0 0
        %1482 = vmatpush1.bf16.xpose.msra.mxu0 0
        %1483 = vmatprep.subr.bf16.mxu0 0
        %1484 = vmatpush1.bf16.xpose.msra.mxu0 0
        %1485 = vmatprep.subr.bf16.mxu0 0
        %1486 = vmatpush1.bf16.xpose.msra.mxu0 0
        %1487 = vmatprep.mubr.bf16.mxu0 0
        %1488 = vmatmul.mubr.bf16.gmra.mrb[0].mxu0 %v1450
        %v1489 = vpop.f32.mrb[0].mxu0
        %v1490 = vadd.f32 %v946, %v1489
        %v1491 = vpop.f32.mrb[0].mxu0
        %v1492 = vpop.f32.mrb[0].mxu0
        %v1493 = vpop.f32.mrb[0].mxu0
        %1494 = vdwg.mxu0
        %v1495 = vsel %vm956, %v1440, -inf
        %1496 = vmax.xlane.f32.xlu0 %v1495
        %v1497 = vpop.xlane.xlu0 %1496
        %v1498 = vsel %vm956, %v1490, -inf
        %1499 = vmax.xlane.f32.xlu0 %v1498
        %v1500 = vpop.xlane.xlu0 %1499
        %v1501 = vsub.f32 %v1440, %v1497
        %v1502 = vsub.f32 %v1490, %v1500
        %v1503 = vmul.f32 %v1501, 1.442695
        %v1504 = vpow.pop %v1503
        %v1505 = vmul.f32 %v1502, 1.442695
        %v1506 = vpow.pop %v1505
        %v1507 = vsel %vm956, %v1504, 0.0
        %1508 = vadd.xlane.f32.xlu0 %v1507
        %v1509 = vpop.xlane.xlu0 %1508
        %v1510 = vsel %vm956, %v1506, 0.0
        %1511 = vadd.xlane.f32.xlu0 %v1510
        %v1512 = vpop.xlane.xlu0 %1511
        %v1513 = vpack.c.bf16 %v1504, %v1504
        %v1514 = vpack.c.bf16 %v1506, %v1506
        %1515 = vrot.lane.b32.xlu0 %v951, 48
        %v1516 = vpop.permute.xlu0 %1515
        %v1518 = vsel %vm956, %v1513, 0
        %v1521 = vsel %vm1077, %v1516, 0
        %1523 = vmatprep.subr.bf16.mxu0 0
        %1524 = vmatpush1.bf16.msra.mxu0 %v1521
        %1525 = vmatprep.subr.bf16.mxu0 0
        %1526 = vmatpush1.bf16.msra.mxu0 0
        %1527 = vmatprep.subr.bf16.mxu0 0
        %1528 = vmatpush1.bf16.msra.mxu0 0
        %1529 = vmatprep.subr.bf16.mxu0 0
        %1530 = vmatpush1.bf16.msra.mxu0 0
        %1531 = vmatprep.subr.bf16.mxu0 0
        %1532 = vmatpush1.bf16.msra.mxu0 0
        %1533 = vmatprep.subr.bf16.mxu0 0
        %1534 = vmatpush1.bf16.msra.mxu0 0
        %1535 = vmatprep.subr.bf16.mxu0 0
        %1536 = vmatpush1.bf16.msra.mxu0 0
        %1537 = vmatprep.subr.bf16.mxu0 0
        %1538 = vmatpush1.bf16.msra.mxu0 0
        %1539 = vmatprep.subr.bf16.mxu0 0
        %1540 = vmatpush1.bf16.msra.mxu0 0
        %1541 = vmatprep.subr.bf16.mxu0 0
        %1542 = vmatpush1.bf16.msra.mxu0 0
        %1543 = vmatprep.subr.bf16.mxu0 0
        %1544 = vmatpush1.bf16.msra.mxu0 0
        %1545 = vmatprep.subr.bf16.mxu0 0
        %1546 = vmatpush1.bf16.msra.mxu0 0
        %1547 = vmatprep.subr.bf16.mxu0 0
        %1548 = vmatpush1.bf16.msra.mxu0 0
        %1549 = vmatprep.subr.bf16.mxu0 0
        %1550 = vmatpush1.bf16.msra.mxu0 0
        %1551 = vmatprep.subr.bf16.mxu0 0
        %1552 = vmatpush1.bf16.msra.mxu0 0
        %1553 = vmatprep.subr.bf16.mxu0 0
        %1554 = vmatpush1.bf16.msra.mxu0 0
        %1555 = vmatprep.mubr.bf16.mxu0 0
        %1556 = vmatmul.mubr.bf16.gmra.mrb[0].mxu0 %v1518
        %v1557 = vpop.f32.mrb[0].mxu0
        %v1558 = vadd.f32 0.0, %v1557
        %v1559 = vpop.f32.mrb[0].mxu0
        %v1560 = vpop.f32.mrb[0].mxu0
        %v1561 = vpop.f32.mrb[0].mxu0
        %1562 = vdwg.mxu0
        %1563 = vrot.lane.b32.xlu0 %v952, 48
        %v1564 = vpop.permute.xlu0 %1563
        %v1566 = vsel %vm956, %v1514, 0
        %v1569 = vsel %vm1077, %v1564, 0
        %1571 = vmatprep.subr.bf16.mxu0 0
        %1572 = vmatpush1.bf16.msra.mxu0 %v1569
        %1573 = vmatprep.subr.bf16.mxu0 0
        %1574 = vmatpush1.bf16.msra.mxu0 0
        %1575 = vmatprep.subr.bf16.mxu0 0
        %1576 = vmatpush1.bf16.msra.mxu0 0
        %1577 = vmatprep.subr.bf16.mxu0 0
        %1578 = vmatpush1.bf16.msra.mxu0 0
        %1579 = vmatprep.subr.bf16.mxu0 0
        %1580 = vmatpush1.bf16.msra.mxu0 0
        %1581 = vmatprep.subr.bf16.mxu0 0
        %1582 = vmatpush1.bf16.msra.mxu0 0
        %1583 = vmatprep.subr.bf16.mxu0 0
        %1584 = vmatpush1.bf16.msra.mxu0 0
        %1585 = vmatprep.subr.bf16.mxu0 0
        %1586 = vmatpush1.bf16.msra.mxu0 0
        %1587 = vmatprep.subr.bf16.mxu0 0
        %1588 = vmatpush1.bf16.msra.mxu0 0
        %1589 = vmatprep.subr.bf16.mxu0 0
        %1590 = vmatpush1.bf16.msra.mxu0 0
        %1591 = vmatprep.subr.bf16.mxu0 0
        %1592 = vmatpush1.bf16.msra.mxu0 0
        %1593 = vmatprep.subr.bf16.mxu0 0
        %1594 = vmatpush1.bf16.msra.mxu0 0
        %1595 = vmatprep.subr.bf16.mxu0 0
        %1596 = vmatpush1.bf16.msra.mxu0 0
        %1597 = vmatprep.subr.bf16.mxu0 0
        %1598 = vmatpush1.bf16.msra.mxu0 0
        %1599 = vmatprep.subr.bf16.mxu0 0
        %1600 = vmatpush1.bf16.msra.mxu0 0
        %1601 = vmatprep.subr.bf16.mxu0 0
        %1602 = vmatpush1.bf16.msra.mxu0 0
        %1603 = vmatprep.mubr.bf16.mxu0 0
        %1604 = vmatmul.mubr.bf16.gmra.mrb[0].mxu0 %v1566
        %v1605 = vpop.f32.mrb[0].mxu0
        %v1606 = vadd.f32 0.0, %v1605
        %v1607 = vpop.f32.mrb[0].mxu0
        %v1608 = vpop.f32.mrb[0].mxu0
        %v1609 = vpop.f32.mrb[0].mxu0
        %1610 = vdwg.mxu0
        %v1611 = vrcp.pop %v1509
        %v1612 = vrcp.pop %v1512
        %v1613 = vmul.f32 %v1558, %v1611
        %v1614 = vmul.f32 %v1606, %v1612
        %1615 = vrot.lane.b32.xlu0 %v949, 104
        %v1616 = vpop.permute.xlu0 %1615
        %1617 = vrot.lane.b32.xlu0 %v951, 72
        %v1618 = vpop.permute.xlu0 %1617
        %v1620 = vsel %vm956, %v1616, 0
        %v1623 = vsel %vm956, %v1618, 0
        %1625 = vmatprep.subr.bf16.mxu0 0
        %1626 = vmatpush1.bf16.xpose.msra.mxu0 %v1623
        %1627 = vmatprep.subr.bf16.mxu0 0
        %1628 = vmatpush1.bf16.xpose.msra.mxu0 0
        %1629 = vmatprep.subr.bf16.mxu0 0
        %1630 = vmatpush1.bf16.xpose.msra.mxu0 0
        %1631 = vmatprep.subr.bf16.mxu0 0
        %1632 = vmatpush1.bf16.xpose.msra.mxu0 0
        %1633 = vmatprep.subr.bf16.mxu0 0
        %1634 = vmatpush1.bf16.xpose.msra.mxu0 0
        %1635 = vmatprep.subr.bf16.mxu0 0
        %1636 = vmatpush1.bf16.xpose.msra.mxu0 0
        %1637 = vmatprep.subr.bf16.mxu0 0
        %1638 = vmatpush1.bf16.xpose.msra.mxu0 0
        %1639 = vmatprep.subr.bf16.mxu0 0
        %1640 = vmatpush1.bf16.xpose.msra.mxu0 0
        %1641 = vmatprep.subr.bf16.mxu0 0
        %1642 = vmatpush1.bf16.xpose.msra.mxu0 0
        %1643 = vmatprep.subr.bf16.mxu0 0
        %1644 = vmatpush1.bf16.xpose.msra.mxu0 0
        %1645 = vmatprep.subr.bf16.mxu0 0
        %1646 = vmatpush1.bf16.xpose.msra.mxu0 0
        %1647 = vmatprep.subr.bf16.mxu0 0
        %1648 = vmatpush1.bf16.xpose.msra.mxu0 0
        %1649 = vmatprep.subr.bf16.mxu0 0
        %1650 = vmatpush1.bf16.xpose.msra.mxu0 0
        %1651 = vmatprep.subr.bf16.mxu0 0
        %1652 = vmatpush1.bf16.xpose.msra.mxu0 0
        %1653 = vmatprep.subr.bf16.mxu0 0
        %1654 = vmatpush1.bf16.xpose.msra.mxu0 0
        %1655 = vmatprep.subr.bf16.mxu0 0
        %1656 = vmatpush1.bf16.xpose.msra.mxu0 0
        %1657 = vmatprep.mubr.bf16.mxu0 0
        %1658 = vmatmul.mubr.bf16.gmra.mrb[0].mxu0 %v1620
        %v1659 = vpop.f32.mrb[0].mxu0
        %v1660 = vadd.f32 %v946, %v1659
        %v1661 = vpop.f32.mrb[0].mxu0
        %v1662 = vpop.f32.mrb[0].mxu0
        %v1663 = vpop.f32.mrb[0].mxu0
        %1664 = vdwg.mxu0
        %1665 = vrot.lane.b32.xlu0 %v950, 104
        %v1666 = vpop.permute.xlu0 %1665
        %1667 = vrot.lane.b32.xlu0 %v952, 72
        %v1668 = vpop.permute.xlu0 %1667
        %v1670 = vsel %vm956, %v1666, 0
        %v1673 = vsel %vm956, %v1668, 0
        %1675 = vmatprep.subr.bf16.mxu0 0
        %1676 = vmatpush1.bf16.xpose.msra.mxu0 %v1673
        %1677 = vmatprep.subr.bf16.mxu0 0
        %1678 = vmatpush1.bf16.xpose.msra.mxu0 0
        %1679 = vmatprep.subr.bf16.mxu0 0
        %1680 = vmatpush1.bf16.xpose.msra.mxu0 0
        %1681 = vmatprep.subr.bf16.mxu0 0
        %1682 = vmatpush1.bf16.xpose.msra.mxu0 0
        %1683 = vmatprep.subr.bf16.mxu0 0
        %1684 = vmatpush1.bf16.xpose.msra.mxu0 0
        %1685 = vmatprep.subr.bf16.mxu0 0
        %1686 = vmatpush1.bf16.xpose.msra.mxu0 0
        %1687 = vmatprep.subr.bf16.mxu0 0
        %1688 = vmatpush1.bf16.xpose.msra.mxu0 0
        %1689 = vmatprep.subr.bf16.mxu0 0
        %1690 = vmatpush1.bf16.xpose.msra.mxu0 0
        %1691 = vmatprep.subr.bf16.mxu0 0
        %1692 = vmatpush1.bf16.xpose.msra.mxu0 0
        %1693 = vmatprep.subr.bf16.mxu0 0
        %1694 = vmatpush1.bf16.xpose.msra.mxu0 0
        %1695 = vmatprep.subr.bf16.mxu0 0
        %1696 = vmatpush1.bf16.xpose.msra.mxu0 0
        %1697 = vmatprep.subr.bf16.mxu0 0
        %1698 = vmatpush1.bf16.xpose.msra.mxu0 0
        %1699 = vmatprep.subr.bf16.mxu0 0
        %1700 = vmatpush1.bf16.xpose.msra.mxu0 0
        %1701 = vmatprep.subr.bf16.mxu0 0
        %1702 = vmatpush1.bf16.xpose.msra.mxu0 0
        %1703 = vmatprep.subr.bf16.mxu0 0
        %1704 = vmatpush1.bf16.xpose.msra.mxu0 0
        %1705 = vmatprep.subr.bf16.mxu0 0
        %1706 = vmatpush1.bf16.xpose.msra.mxu0 0
        %1707 = vmatprep.mubr.bf16.mxu0 0
        %1708 = vmatmul.mubr.bf16.gmra.mrb[0].mxu0 %v1670
        %v1709 = vpop.f32.mrb[0].mxu0
        %v1710 = vadd.f32 %v946, %v1709
        %v1711 = vpop.f32.mrb[0].mxu0
        %v1712 = vpop.f32.mrb[0].mxu0
        %v1713 = vpop.f32.mrb[0].mxu0
        %1714 = vdwg.mxu0
        %v1715 = vsel %vm956, %v1660, -inf
        %1716 = vmax.xlane.f32.xlu0 %v1715
        %v1717 = vpop.xlane.xlu0 %1716
        %v1718 = vsel %vm956, %v1710, -inf
        %1719 = vmax.xlane.f32.xlu0 %v1718
        %v1720 = vpop.xlane.xlu0 %1719
        %v1721 = vsub.f32 %v1660, %v1717
        %v1722 = vsub.f32 %v1710, %v1720
        %v1723 = vmul.f32 %v1721, 1.442695
        %v1724 = vpow.pop %v1723
        %v1725 = vmul.f32 %v1722, 1.442695
        %v1726 = vpow.pop %v1725
        %v1727 = vsel %vm956, %v1724, 0.0
        %1728 = vadd.xlane.f32.xlu0 %v1727
        %v1729 = vpop.xlane.xlu0 %1728
        %v1730 = vsel %vm956, %v1726, 0.0
        %1731 = vadd.xlane.f32.xlu0 %v1730
        %v1732 = vpop.xlane.xlu0 %1731
        %v1733 = vpack.c.bf16 %v1724, %v1724
        %v1734 = vpack.c.bf16 %v1726, %v1726
        %1735 = vrot.lane.b32.xlu0 %v951, 40
        %v1736 = vpop.permute.xlu0 %1735
        %v1738 = vsel %vm956, %v1733, 0
        %v1741 = vsel %vm1077, %v1736, 0
        %1743 = vmatprep.subr.bf16.mxu0 0
        %1744 = vmatpush1.bf16.msra.mxu0 %v1741
        %1745 = vmatprep.subr.bf16.mxu0 0
        %1746 = vmatpush1.bf16.msra.mxu0 0
        %1747 = vmatprep.subr.bf16.mxu0 0
        %1748 = vmatpush1.bf16.msra.mxu0 0
        %1749 = vmatprep.subr.bf16.mxu0 0
        %1750 = vmatpush1.bf16.msra.mxu0 0
        %1751 = vmatprep.subr.bf16.mxu0 0
        %1752 = vmatpush1.bf16.msra.mxu0 0
        %1753 = vmatprep.subr.bf16.mxu0 0
        %1754 = vmatpush1.bf16.msra.mxu0 0
        %1755 = vmatprep.subr.bf16.mxu0 0
        %1756 = vmatpush1.bf16.msra.mxu0 0
        %1757 = vmatprep.subr.bf16.mxu0 0
        %1758 = vmatpush1.bf16.msra.mxu0 0
        %1759 = vmatprep.subr.bf16.mxu0 0
        %1760 = vmatpush1.bf16.msra.mxu0 0
        %1761 = vmatprep.subr.bf16.mxu0 0
        %1762 = vmatpush1.bf16.msra.mxu0 0
        %1763 = vmatprep.subr.bf16.mxu0 0
        %1764 = vmatpush1.bf16.msra.mxu0 0
        %1765 = vmatprep.subr.bf16.mxu0 0
        %1766 = vmatpush1.bf16.msra.mxu0 0
        %1767 = vmatprep.subr.bf16.mxu0 0
        %1768 = vmatpush1.bf16.msra.mxu0 0
        %1769 = vmatprep.subr.bf16.mxu0 0
        %1770 = vmatpush1.bf16.msra.mxu0 0
        %1771 = vmatprep.subr.bf16.mxu0 0
        %1772 = vmatpush1.bf16.msra.mxu0 0
        %1773 = vmatprep.subr.bf16.mxu0 0
        %1774 = vmatpush1.bf16.msra.mxu0 0
        %1775 = vmatprep.mubr.bf16.mxu0 0
        %1776 = vmatmul.mubr.bf16.gmra.mrb[0].mxu0 %v1738
        %v1777 = vpop.f32.mrb[0].mxu0
        %v1778 = vadd.f32 0.0, %v1777
        %v1779 = vpop.f32.mrb[0].mxu0
        %v1780 = vpop.f32.mrb[0].mxu0
        %v1781 = vpop.f32.mrb[0].mxu0
        %1782 = vdwg.mxu0
        %1783 = vrot.lane.b32.xlu0 %v952, 40
        %v1784 = vpop.permute.xlu0 %1783
        %v1786 = vsel %vm956, %v1734, 0
        %v1789 = vsel %vm1077, %v1784, 0
        %1791 = vmatprep.subr.bf16.mxu0 0
        %1792 = vmatpush1.bf16.msra.mxu0 %v1789
        %1793 = vmatprep.subr.bf16.mxu0 0
        %1794 = vmatpush1.bf16.msra.mxu0 0
        %1795 = vmatprep.subr.bf16.mxu0 0
        %1796 = vmatpush1.bf16.msra.mxu0 0
        %1797 = vmatprep.subr.bf16.mxu0 0
        %1798 = vmatpush1.bf16.msra.mxu0 0
        %1799 = vmatprep.subr.bf16.mxu0 0
        %1800 = vmatpush1.bf16.msra.mxu0 0
        %1801 = vmatprep.subr.bf16.mxu0 0
        %1802 = vmatpush1.bf16.msra.mxu0 0
        %1803 = vmatprep.subr.bf16.mxu0 0
        %1804 = vmatpush1.bf16.msra.mxu0 0
        %1805 = vmatprep.subr.bf16.mxu0 0
        %1806 = vmatpush1.bf16.msra.mxu0 0
        %1807 = vmatprep.subr.bf16.mxu0 0
        %1808 = vmatpush1.bf16.msra.mxu0 0
        %1809 = vmatprep.subr.bf16.mxu0 0
        %1810 = vmatpush1.bf16.msra.mxu0 0
        %1811 = vmatprep.subr.bf16.mxu0 0
        %1812 = vmatpush1.bf16.msra.mxu0 0
        %1813 = vmatprep.subr.bf16.mxu0 0
        %1814 = vmatpush1.bf16.msra.mxu0 0
        %1815 = vmatprep.subr.bf16.mxu0 0
        %1816 = vmatpush1.bf16.msra.mxu0 0
        %1817 = vmatprep.subr.bf16.mxu0 0
        %1818 = vmatpush1.bf16.msra.mxu0 0
        %1819 = vmatprep.subr.bf16.mxu0 0
        %1820 = vmatpush1.bf16.msra.mxu0 0
        %1821 = vmatprep.subr.bf16.mxu0 0
        %1822 = vmatpush1.bf16.msra.mxu0 0
        %1823 = vmatprep.mubr.bf16.mxu0 0
        %1824 = vmatmul.mubr.bf16.gmra.mrb[0].mxu0 %v1786
        %v1825 = vpop.f32.mrb[0].mxu0
        %v1826 = vadd.f32 0.0, %v1825
        %v1827 = vpop.f32.mrb[0].mxu0
        %v1828 = vpop.f32.mrb[0].mxu0
        %v1829 = vpop.f32.mrb[0].mxu0
        %1830 = vdwg.mxu0
        %v1831 = vrcp.pop %v1729
        %v1832 = vrcp.pop %v1732
        %v1833 = vmul.f32 %v1778, %v1831
        %v1834 = vmul.f32 %v1826, %v1832
        %1837 = vrot.lane.b32.xlu0 %v1393, 8
        %v1838 = vpop.permute.xlu0 %1837
        %1839 = vrot.lane.b32.xlu0 %v1394, 8
        %v1840 = vpop.permute.xlu0 %1839
        %1845 = vrot.lane.b32.xlu0 %v1613, 16
        %v1846 = vpop.permute.xlu0 %1845
        %1847 = vrot.lane.b32.xlu0 %v1614, 16
        %v1848 = vpop.permute.xlu0 %1847
        %1853 = vrot.lane.b32.xlu0 %v1833, 24
        %v1854 = vpop.permute.xlu0 %1853
        %1855 = vrot.lane.b32.xlu0 %v1834, 24
        %v1856 = vpop.permute.xlu0 %1855
        %v1859 = vsel %vm956, %v1171, %v1838
        %v1860 = vsel %vm956, %v1172, %v1840
        %vm1861 = vcmask 130048
        %v1862 = vsel %vm1861, %v1859, %v1846
        %v1863 = vsel %vm1861, %v1860, %v1848
        %vm1864 = vcmask 195584
        %v1865 = vsel %vm1864, %v1862, %v1854
        %v1866 = vsel %vm1864, %v1863, %v1856
        %v1867 = vpack.c.bf16 %v1866, %v1865
        %v1868 = vld [vmem:[%s686] sm:$0xf]
        %v1869 = vld [vmem:[%s686 + $0x4] sm:$0xf]
        %v1870 = vld [vmem:[%s686 + $0x8] sm:$0xf]
        %v1871 = vld [vmem:[%s686 + $0xc] sm:$0xf]
        %v1872 = vld [vmem:[%s694] sm:$0x1]
        %v1874 = vlaneseq
        %v1875 = vshrl.u32 %v1874, 7
        %v1876 = vsub.s32 0, %v1875
        %v1877 = vrot.slane %v1872, %v1876
        %v1883 = vunpack.c.l.b16 %v1868
        %v1884 = vunpack.c.l.b16 %v1869
        %v1885 = vunpack.c.l.b16 %v1870
        %v1886 = vunpack.c.l.b16 %v1871
        %v1887 = vpack.c.b16 %v1884, %v1883
        %v1888 = vpack.c.b16 %v1886, %v1885
        %v1892 = vsel %vm841, %v1867, 0
        %1894 = vmatprep.subr.bf16.mxu0 0
        %1895 = vmatpush1.bf16.msra.mxu0 %v1887
        %1896 = vmatprep.subr.bf16.mxu0 0
        %1897 = vmatpush1.bf16.msra.mxu0 %v1888
        %1898 = vmatprep.subr.bf16.mxu0 0
        %1899 = vmatpush1.bf16.msra.mxu0 0
        %1900 = vmatprep.subr.bf16.mxu0 0
        %1901 = vmatpush1.bf16.msra.mxu0 0
        %1902 = vmatprep.subr.bf16.mxu0 0
        %1903 = vmatpush1.bf16.msra.mxu0 0
        %1904 = vmatprep.subr.bf16.mxu0 0
        %1905 = vmatpush1.bf16.msra.mxu0 0
        %1906 = vmatprep.subr.bf16.mxu0 0
        %1907 = vmatpush1.bf16.msra.mxu0 0
        %1908 = vmatprep.subr.bf16.mxu0 0
        %1909 = vmatpush1.bf16.msra.mxu0 0
        %1910 = vmatprep.subr.bf16.mxu0 0
        %1911 = vmatpush1.bf16.msra.mxu0 0
        %1912 = vmatprep.subr.bf16.mxu0 0
        %1913 = vmatpush1.bf16.msra.mxu0 0
        %1914 = vmatprep.subr.bf16.mxu0 0
        %1915 = vmatpush1.bf16.msra.mxu0 0
        %1916 = vmatprep.subr.bf16.mxu0 0
        %1917 = vmatpush1.bf16.msra.mxu0 0
        %1918 = vmatprep.subr.bf16.mxu0 0
        %1919 = vmatpush1.bf16.msra.mxu0 0
        %1920 = vmatprep.subr.bf16.mxu0 0
        %1921 = vmatpush1.bf16.msra.mxu0 0
        %1922 = vmatprep.subr.bf16.mxu0 0
        %1923 = vmatpush1.bf16.msra.mxu0 0
        %1924 = vmatprep.subr.bf16.mxu0 0
        %1925 = vmatpush1.bf16.msra.mxu0 0
        %1926 = vmatprep.mubr.bf16.mxu0 0
        %1927 = vmatmul.mubr.bf16.gmra.mrb[0].mxu0 %v1892
        %v1928 = vpop.f32.mrb[0].mxu0
        %v1929 = vadd.f32 %v1877, %v1928
        %v1930 = vpop.f32.mrb[0].mxu0
        %v1931 = vpop.f32.mrb[0].mxu0
        %v1932 = vadd.f32 %v1877, %v1931
        %v1933 = vpop.f32.mrb[0].mxu0
        %1934 = vdwg.mxu0
        %v1935 = vadd.f32 %v837, %v1929
        %v1936 = vadd.f32 %v838, %v1932
        %v1937 = vld [vmem:[%s702] sm:$0x1]
        %v1938 = vld [vmem:[%s710] sm:$0x1]
        %v1939 = vsel %vm841, %v1935, 0.0
        %1940 = vadd.xlane.f32.xlu0 %v1939
        %v1941 = vpop.xlane.xlu0 %1940
        %v1942 = vsel %vm841, %v1936, 0.0
        %1943 = vadd.xlane.f32.xlu0 %v1942
        %v1944 = vpop.xlane.xlu0 %1943
        %v1945 = vmul.f32 %v1941, %v848
        %v1946 = vmul.f32 %v1944, %v848
        %v1947 = vsub.f32 %v1935, %v1945
        %v1948 = vsub.f32 %v1936, %v1946
        %v1949 = vmul.f32 %v1947, %v1947
        %v1950 = vmul.f32 %v1948, %v1948
        %v1951 = vsel %vm841, %v1949, 0.0
        %1952 = vadd.xlane.f32.xlu0 %v1951
        %v1953 = vpop.xlane.xlu0 %1952
        %v1954 = vsel %vm841, %v1950, 0.0
        %1955 = vadd.xlane.f32.xlu0 %v1954
        %v1956 = vpop.xlane.xlu0 %1955
        %v1957 = vmul.f32 %v1953, %v848
        %v1958 = vmul.f32 %v1956, %v848
        %v1959 = vadd.f32 %v1957, 1e-05
        %v1960 = vadd.f32 %v1958, 1e-05
        %v1961 = vrsqrt.pop %v1959
        %v1962 = vrsqrt.pop %v1960
        %v1963 = vmul.f32 %v1947, %v1961
        %v1964 = vmul.f32 %v1948, %v1962
        %v1966 = vlaneseq
        %v1967 = vshrl.u32 %v1966, 7
        %v1968 = vsub.s32 0, %v1967
        %v1969 = vrot.slane %v1937, %v1968
        %v1971 = vmul.f32 %v1963, %v1969
        %v1972 = vmul.f32 %v1964, %v1969
        %v1974 = vlaneseq
        %v1975 = vshrl.u32 %v1974, 7
        %v1976 = vsub.s32 0, %v1975
        %v1977 = vrot.slane %v1938, %v1976
        %v1979 = vadd.f32 %v1971, %v1977
        %v1980 = vadd.f32 %v1972, %v1977
        %v1981 = vpack.c.bf16 %v1980, %v1979
        %v1982 = vld [vmem:[%s719] sm:$0xf]
        %v1983 = vld [vmem:[%s719 + $0x4] sm:$0xf]
        %v1984 = vld [vmem:[%s719 + $0x8] sm:$0xf]
        %v1985 = vld [vmem:[%s719 + $0xc] sm:$0xf]
        %v1986 = vld [vmem:[%s727] sm:$0x1]
        %v1988 = vlaneseq
        %v1989 = vshrl.u32 %v1988, 7
        %v1990 = vsub.s32 0, %v1989
        %v1991 = vrot.slane %v1986, %v1990
        %v1997 = vunpack.c.l.b16 %v1982
        %v1998 = vunpack.c.l.b16 %v1983
        %v1999 = vunpack.c.l.b16 %v1984
        %v2000 = vunpack.c.l.b16 %v1985
        %v2001 = vpack.c.b16 %v1998, %v1997
        %v2002 = vpack.c.b16 %v2000, %v1999
        %v2006 = vsel %vm841, %v1981, 0
        %2008 = vmatprep.subr.bf16.mxu0 0
        %2009 = vmatpush1.bf16.msra.mxu0 %v2001
        %2010 = vmatprep.subr.bf16.mxu0 0
        %2011 = vmatpush1.bf16.msra.mxu0 %v2002
        %2012 = vmatprep.subr.bf16.mxu0 0
        %2013 = vmatpush1.bf16.msra.mxu0 0
        %2014 = vmatprep.subr.bf16.mxu0 0
        %2015 = vmatpush1.bf16.msra.mxu0 0
        %2016 = vmatprep.subr.bf16.mxu0 0
        %2017 = vmatpush1.bf16.msra.mxu0 0
        %2018 = vmatprep.subr.bf16.mxu0 0
        %2019 = vmatpush1.bf16.msra.mxu0 0
        %2020 = vmatprep.subr.bf16.mxu0 0
        %2021 = vmatpush1.bf16.msra.mxu0 0
        %2022 = vmatprep.subr.bf16.mxu0 0
        %2023 = vmatpush1.bf16.msra.mxu0 0
        %2024 = vmatprep.subr.bf16.mxu0 0
        %2025 = vmatpush1.bf16.msra.mxu0 0
        %2026 = vmatprep.subr.bf16.mxu0 0
        %2027 = vmatpush1.bf16.msra.mxu0 0
        %2028 = vmatprep.subr.bf16.mxu0 0
        %2029 = vmatpush1.bf16.msra.mxu0 0
        %2030 = vmatprep.subr.bf16.mxu0 0
        %2031 = vmatpush1.bf16.msra.mxu0 0
        %2032 = vmatprep.subr.bf16.mxu0 0
        %2033 = vmatpush1.bf16.msra.mxu0 0
        %2034 = vmatprep.subr.bf16.mxu0 0
        %2035 = vmatpush1.bf16.msra.mxu0 0
        %2036 = vmatprep.subr.bf16.mxu0 0
        %2037 = vmatpush1.bf16.msra.mxu0 0
        %2038 = vmatprep.subr.bf16.mxu0 0
        %2039 = vmatpush1.bf16.msra.mxu0 0
        %2040 = vmatprep.mubr.bf16.mxu0 0
        %2041 = vmatmul.mubr.bf16.gmra.mrb[0].mxu0 %v2006
        %v2042 = vpop.f32.mrb[0].mxu0
        %v2043 = vadd.f32 %v1991, %v2042
        %v2044 = vpop.f32.mrb[0].mxu0
        %v2045 = vpop.f32.mrb[0].mxu0
        %v2046 = vadd.f32 %v1991, %v2045
        %v2047 = vpop.f32.mrb[0].mxu0
        %2048 = vdwg.mxu0
        %v2049 = vmax.f32 %v2043, 0.0
        %v2050 = vmax.f32 %v2046, 0.0
        %v2051 = vpack.c.bf16 %v2050, %v2049
        %v2052 = vld [vmem:[%s736] sm:$0xf]
        %v2053 = vld [vmem:[%s736 + $0x4] sm:$0xf]
        %v2054 = vld [vmem:[%s736 + $0x8] sm:$0xf]
        %v2055 = vld [vmem:[%s736 + $0xc] sm:$0xf]
        %v2056 = vld [vmem:[%s736 + $0x10] sm:$0xf]
        %v2057 = vld [vmem:[%s736 + $0x14] sm:$0xf]
        %v2058 = vld [vmem:[%s736 + $0x18] sm:$0xf]
        %v2059 = vld [vmem:[%s736 + $0x1c] sm:$0xf]
        %v2060 = vld [vmem:[%s736 + $0x20] sm:$0xf]
        %v2061 = vld [vmem:[%s736 + $0x24] sm:$0xf]
        %v2062 = vld [vmem:[%s736 + $0x28] sm:$0xf]
        %v2063 = vld [vmem:[%s736 + $0x2c] sm:$0xf]
        %v2064 = vld [vmem:[%s736 + $0x30] sm:$0xf]
        %v2065 = vld [vmem:[%s736 + $0x34] sm:$0xf]
        %v2066 = vld [vmem:[%s736 + $0x38] sm:$0xf]
        %v2067 = vld [vmem:[%s736 + $0x3c] sm:$0xf]
        %v2068 = vld [vmem:[%s744] sm:$0x1]
        %v2070 = vlaneseq
        %v2071 = vshrl.u32 %v2070, 7
        %v2072 = vsub.s32 0, %v2071
        %v2073 = vrot.slane %v2068, %v2072
        %v2091 = vunpack.c.l.b16 %v2052
        %v2092 = vunpack.c.l.b16 %v2053
        %v2093 = vunpack.c.l.b16 %v2054
        %v2094 = vunpack.c.l.b16 %v2055
        %v2095 = vunpack.c.l.b16 %v2056
        %v2096 = vunpack.c.l.b16 %v2057
        %v2097 = vunpack.c.l.b16 %v2058
        %v2098 = vunpack.c.l.b16 %v2059
        %v2099 = vunpack.c.l.b16 %v2060
        %v2100 = vunpack.c.l.b16 %v2061
        %v2101 = vunpack.c.l.b16 %v2062
        %v2102 = vunpack.c.l.b16 %v2063
        %v2103 = vunpack.c.l.b16 %v2064
        %v2104 = vunpack.c.l.b16 %v2065
        %v2105 = vunpack.c.l.b16 %v2066
        %v2106 = vunpack.c.l.b16 %v2067
        %v2107 = vpack.c.b16 %v2092, %v2091
        %v2108 = vpack.c.b16 %v2094, %v2093
        %v2109 = vpack.c.b16 %v2096, %v2095
        %v2110 = vpack.c.b16 %v2098, %v2097
        %v2111 = vpack.c.b16 %v2100, %v2099
        %v2112 = vpack.c.b16 %v2102, %v2101
        %v2113 = vpack.c.b16 %v2104, %v2103
        %v2114 = vpack.c.b16 %v2106, %v2105
        %2123 = vmatprep.subr.bf16.mxu0 0
        %2124 = vmatpush1.bf16.msra.mxu0 %v2107
        %2125 = vmatprep.subr.bf16.mxu0 0
        %2126 = vmatpush1.bf16.msra.mxu0 %v2108
        %2127 = vmatprep.subr.bf16.mxu0 0
        %2128 = vmatpush1.bf16.msra.mxu0 %v2109
        %2129 = vmatprep.subr.bf16.mxu0 0
        %2130 = vmatpush1.bf16.msra.mxu0 %v2110
        %2131 = vmatprep.subr.bf16.mxu0 0
        %2132 = vmatpush1.bf16.msra.mxu0 %v2111
        %2133 = vmatprep.subr.bf16.mxu0 0
        %2134 = vmatpush1.bf16.msra.mxu0 %v2112
        %2135 = vmatprep.subr.bf16.mxu0 0
        %2136 = vmatpush1.bf16.msra.mxu0 %v2113
        %2137 = vmatprep.subr.bf16.mxu0 0
        %2138 = vmatpush1.bf16.msra.mxu0 %v2114
        %2139 = vmatprep.subr.bf16.mxu0 0
        %2140 = vmatpush1.bf16.msra.mxu0 0
        %2141 = vmatprep.subr.bf16.mxu0 0
        %2142 = vmatpush1.bf16.msra.mxu0 0
        %2143 = vmatprep.subr.bf16.mxu0 0
        %2144 = vmatpush1.bf16.msra.mxu0 0
        %2145 = vmatprep.subr.bf16.mxu0 0
        %2146 = vmatpush1.bf16.msra.mxu0 0
        %2147 = vmatprep.subr.bf16.mxu0 0
        %2148 = vmatpush1.bf16.msra.mxu0 0
        %2149 = vmatprep.subr.bf16.mxu0 0
        %2150 = vmatpush1.bf16.msra.mxu0 0
        %2151 = vmatprep.subr.bf16.mxu0 0
        %2152 = vmatpush1.bf16.msra.mxu0 0
        %2153 = vmatprep.subr.bf16.mxu0 0
        %2154 = vmatpush1.bf16.msra.mxu0 0
        %2155 = vmatprep.mubr.bf16.mxu0 0
        %2156 = vmatmul.mubr.bf16.gmra.mrb[0].mxu0 %v2051
        %v2157 = vpop.f32.mrb[0].mxu0
        %v2158 = vadd.f32 %v2073, %v2157
        %v2159 = vpop.f32.mrb[0].mxu0
        %v2160 = vpop.f32.mrb[0].mxu0
        %v2161 = vadd.f32 %v2073, %v2160
        %v2162 = vpop.f32.mrb[0].mxu0
        %2163 = vdwg.mxu0
        %v2164 = vadd.f32 %v1935, %v2158
        %v2165 = vadd.f32 %v1936, %v2161
        %2166 = vst.msk [vmem:[#allocation18] sm:$0xff] %vm841, %v2164
        %2167 = vst.msk [vmem:[#allocation18 + $0x8] sm:$0xff] %vm841, %v2165
        // Predicated region
        $region129: #{tpu_custom_call.1} parent=71 // pred_check
          %p2168 = pneg %p390
        $region130: #{tpu_custom_call.1} parent=71 // pred_check_branch
          %2170 = sbr.rel (%p2168) target = $region132
        $region131: #{tpu_custom_call.1} parent=71 // pred_region
          %s2171 = smul.u32 2, %s31
          %s2173 = ssub.s32 256, 256
          %2174 = vsyncadd [#allocation4], %s2173
          %s2175 = smul.addr %s2171, 128
          %s2176 = scalar_lea.hbm %s13, %s2175
          %s2177 = sshll.u32 [#allocation18], 4
          %s2178 = int_to_ptr.vmem [resolvable:$true] %s2177
          %2183 = dma.vmem_to_hbm [thread:$0]  %s2178, 256, %s2176, [#allocation4], 128, 128, 8
        $region132: #{tpu_custom_call.1} parent=71 // pred_fallthru
          _
        // Predicated region
        $region133: #{tpu_custom_call.1} parent=71 // pred_check
          %p2184 = pneg %p390
        $region134: #{tpu_custom_call.1} parent=71 // pred_check_branch
          %2186 = sbr.rel (%p2184) target = $region136
        $region135: #{tpu_custom_call.1} parent=71 // pred_region
          %2187 = dma.done [#allocation4], 256
        $region136: #{tpu_custom_call.1} parent=71 // pred_fallthru
          _
      $region72: #{tpu_custom_call.1} parent=5 // pred_fallthru
        _
      %p2188 = scmp.le.s32.totalorder 2, %s22
      // Predicated region
      $region137: #{tpu_custom_call.1} parent=5 // pred_check
        %p2189 = pneg %p2188
      $region138: #{tpu_custom_call.1} parent=5 // pred_check_branch
        %2191 = sbr.rel (%p2189) target = $region140
      $region139: #{tpu_custom_call.1} parent=5 // pred_region
        %s2192 = ssub.s32 %s22, 2
      $region140: #{tpu_custom_call.1} parent=5 // pred_fallthru
        _
    $region6: #{tpu_custom_call.1} parent=1 // loop_footer
      %s26 = sadd.s32 1, %s22
    $region7: #{tpu_custom_call.1} parent=1 // loop_footer_branch
      %21 = sbr.rel target = $region3
    $region8: #{tpu_custom_call.1} parent=1 // loop_exit
      _
    %2193 = vsyncpa [#allocation3], 1
    %s2194 = scalar_lea.sflag [#allocation3], 1
    %2195 = vsyncpa %s2194, 1
    %2196 = vsyncpa [#allocation6], 1
    %2197 = vsyncpa [#allocation4], 1
    %s2198 = scalar_lea.sflag [#allocation4], 1
    %2199 = vsyncpa %s2198, 1

</llo_original>
